<compile_context>
chip_gen: v5e
topology: v5e:2x2
jax: 0.10.0
libtpu: 0.0.40
codegen_flags: <defaults>
</compile_context>

<pallas_src>
import jax
import jax.numpy as jnp
from jax.experimental import pallas as pl
from jax.experimental.pallas import tpu as pltpu


def _round_up(x: int, m: int) -> int:
    return ((x + m - 1) // m) * m


def _value_mlp_kernel(x_ref, w1_ref, b1_ref, w2_ref, b2_ref, w3_ref, o_ref):
    # Layer 1: (TM, Dp) bf16 @ (Dp, H1p) bf16 -> f32 acc, bias + ReLU, back to bf16.
    h1 = jnp.dot(x_ref[...], w1_ref[...], preferred_element_type=jnp.float32)
    h1 = jnp.maximum(h1 + b1_ref[...], 0.0).astype(jnp.bfloat16)
    # Layer 2: (TM, H1p) bf16 @ (H1p, H2p) bf16 -> f32 acc, bias + ReLU (stays f32 for head).
    h2 = jnp.dot(h1, w2_ref[...], preferred_element_type=jnp.float32)
    h2 = jnp.maximum(h2 + b2_ref[...], 0.0)
    # Head: 300(->384)-to-1 done on the VPU/XLU (multiply + lane reduce), not the MXU.
    v = jnp.sum(h2 * w3_ref[...], axis=-1, keepdims=True)  # (TM, 1) f32
    o_ref[...] = v.astype(o_ref.dtype)


def init_params(key, features_dim, hidden_sizes=(400, 300)):
    """PyTorch nn.Linear-style init: U(-1/sqrt(fan_in), 1/sqrt(fan_in)). Returns f32 params."""
    dims = [features_dim] + list(hidden_sizes) + [1]
    params = []
    for i in range(len(dims) - 1):
        fan_in, fan_out = dims[i], dims[i + 1]
        key, kw, kb = jax.random.split(key, 3)
        bound = float(fan_in) ** -0.5
        w = jax.random.uniform(kw, (fan_in, fan_out), jnp.float32, -bound, bound)
        b = jax.random.uniform(kb, (fan_out,), jnp.float32, -bound, bound)
        params.append((w, b))
    return params


def pack_params(params):
    """One-time packing: zero-pad dims to multiples of 128, cast matmul weights to bf16."""
    (w1, b1), (w2, b2), (w3, b3) = params
    d, h1 = w1.shape
    h2 = w2.shape[1]
    dp, h1p, h2p = _round_up(d, 128), _round_up(h1, 128), _round_up(h2, 128)

    w1p = jnp.zeros((dp, h1p), jnp.bfloat16).at[:d, :h1].set(w1.astype(jnp.bfloat16))
    b1p = jnp.zeros((1, h1p), jnp.float32).at[0, :h1].set(b1)
    w2p = jnp.zeros((h1p, h2p), jnp.bfloat16).at[:h1, :h2].set(w2.astype(jnp.bfloat16))
    b2p = jnp.zeros((1, h2p), jnp.float32).at[0, :h2].set(b2)
    w3p = jnp.zeros((1, h2p), jnp.float32).at[0, :h2].set(w3[:, 0])
    b3s = b3[0]  # scalar, added in the wrapper (keeps it out of VMEM entirely)
    return (w1p, b1p, w2p, b2p, w3p, b3s)


def value_network_forward(obs, packed, tile_m=None):
    """obs: (B, C, H, W) float32 (NCHW, like PyTorch). Returns (B,) state values."""
    w1p, b1p, w2p, b2p, w3p, b3s = packed
    b = obs.shape[0]
    x = obs.reshape(b, -1).astype(jnp.float32)  # FlattenExtractor
    d = x.shape[1]
    dp, h1p = w1p.shape
    h2p = w2p.shape[1]

    # Batch tile: moderate (<=256) keeps VMEM use small on v7x's 64 MiB while staying at the
    # HBM roofline on v5e/v6e; small batches collapse to a single 8-row tile.
    tm = tile_m if tile_m is not None else min(256, _round_up(b, 8))
    bp = _round_up(b, tm)

    # Pad batch rows and feature lanes with zeros (sliced off / multiplied by zero weights).
    xp = jnp.zeros((bp, dp), jnp.bfloat16).at[:b, :d].set(x.astype(jnp.bfloat16))

    flops = 2 * bp * (dp * h1p + h1p * h2p + h2p)
    bytes_accessed = (
        xp.size * 2                       # bf16 x
        + (w1p.size + w2p.size) * 2       # bf16 weights (resident, fetched once)
        + (b1p.size + b2p.size + w3p.size) * 4
        + bp * 4                          # f32 output
    )

    out = pl.pallas_call(
        _value_mlp_kernel,
        out_shape=jax.ShapeDtypeStruct((bp, 1), jnp.float32),
        grid=(bp // tm,),
        in_specs=[
            pl.BlockSpec((tm, dp), lambda i: (i, 0)),     # x: batch-tiled, double-buffered
            pl.BlockSpec((dp, h1p), lambda i: (0, 0)),    # w1: resident across grid steps
            pl.BlockSpec((1, h1p), lambda i: (0, 0)),     # b1
            pl.BlockSpec((h1p, h2p), lambda i: (0, 0)),   # w2
            pl.BlockSpec((1, h2p), lambda i: (0, 0)),     # b2
            pl.BlockSpec((1, h2p), lambda i: (0, 0)),     # w3 row (head)
        ],
        out_specs=pl.BlockSpec((tm, 1), lambda i: (i, 0)),
        compiler_params=pltpu.CompilerParams(
            dimension_semantics=("parallel",),
        ),
        cost_estimate=pl.CostEstimate(
            flops=int(flops), transcendentals=0, bytes_accessed=int(bytes_accessed)
        ),
    )(xp, w1p, b1p, w2p, b2p, w3p)

    # values.squeeze(-1); output bias added here (scalar, no VMEM buffer needed).
    return out[:b, 0] + b3s


def _reference_forward(obs, packed):
    """Plain-JAX mirror of the kernel (same padded bf16 params, f32 accumulation)."""
    w1p, b1p, w2p, b2p, w3p, b3s = packed
    b = obs.shape[0]
    x = obs.reshape(b, -1).astype(jnp.float32)
    d = x.shape[1]
    dp = w1p.shape[0]
    xp = jnp.zeros((b, dp), jnp.bfloat16).at[:, :d].set(x.astype(jnp.bfloat16))
    h1 = jnp.maximum(jnp.dot(xp, w1p, preferred_element_type=jnp.float32) + b1p, 0.0)
    h1 = h1.astype(jnp.bfloat16)
    h2 = jnp.maximum(jnp.dot(h1, w2p, preferred_element_type=jnp.float32) + b2p, 0.0)
    return jnp.sum(h2 * w3p, axis=-1) + b3s


if __name__ == "__main__":
    key = jax.random.PRNGKey(0)
    k_obs, k_par = jax.random.split(key)

    # Small image-like observation space: B=2, C=4, H=W=16 -> features_dim = 1024
    B, C, H, W = 2, 4, 16, 16
    obs = jax.random.normal(k_obs, (B, C, H, W), dtype=jnp.float32)

    features_dim = C * H * W
    params = init_params(k_par, features_dim, hidden_sizes=(400, 300))  # module defaults
    packed = pack_params(params)

    values = jax.block_until_ready(value_network_forward(obs, packed))
    ref = jax.block_until_ready(_reference_forward(obs, packed))
    assert values.shape == (B,)
    assert jnp.allclose(values, ref, atol=1e-2, rtol=1e-2), (values, ref)

    # Exercise the multi-tile grid path (several batch tiles + padded batch rows).
    k_obs2, _ = jax.random.split(k_obs)
    obs2 = jax.random.normal(k_obs2, (20, C, H, W), dtype=jnp.float32)
    values2 = jax.block_until_ready(value_network_forward(obs2, packed, tile_m=8))
    ref2 = jax.block_until_ready(_reference_forward(obs2, packed))
    assert values2.shape == (20,)
    assert jnp.allclose(values2, ref2, atol=1e-2, rtol=1e-2), (values2, ref2)

    print("KERNEL_OK")
</pallas_src>

<mosaic_0001>
module attributes {stable_mosaic.version = 11 : i64} {
  func.func @_value_mlp_kernel(%arg0: i32, %arg1: memref<8x1024xbf16, #tpu.memory_space<vmem>>, %arg2: memref<1024x512xbf16, #tpu.memory_space<vmem>>, %arg3: memref<1x512xf32, #tpu.memory_space<vmem>>, %arg4: memref<512x384xbf16, #tpu.memory_space<vmem>>, %arg5: memref<1x384xf32, #tpu.memory_space<vmem>>, %arg6: memref<1x384xf32, #tpu.memory_space<vmem>>, %arg7: memref<8x1xf32, #tpu.memory_space<vmem>>) attributes {dimension_semantics = [#tpu.dimension_semantics<parallel>], iteration_bounds = array<i64: 1>, scalar_prefetch = 0 : i64, scratch_operands = 0 : i64, tpu.core_type = #tpu.core_type<tc>, window_params = [{transform_indices = @transform_0, window_bounds = array<i64: 8, 1024>}, {pipeline_mode = #tpu.pipeline_mode<synchronous>, transform_indices = @transform_1, window_bounds = array<i64: 1024, 512>}, {pipeline_mode = #tpu.pipeline_mode<synchronous>, transform_indices = @transform_2, window_bounds = array<i64: 1, 512>}, {pipeline_mode = #tpu.pipeline_mode<synchronous>, transform_indices = @transform_3, window_bounds = array<i64: 512, 384>}, {pipeline_mode = #tpu.pipeline_mode<synchronous>, transform_indices = @transform_4, window_bounds = array<i64: 1, 384>}, {pipeline_mode = #tpu.pipeline_mode<synchronous>, transform_indices = @transform_5, window_bounds = array<i64: 1, 384>}, {transform_indices = @transform_6, window_bounds = array<i64: 8, 1>}]} {
    %c0 = arith.constant 0 : index
    %c0_0 = arith.constant 0 : index
    %0 = vector.load %arg1[%c0, %c0_0] : memref<8x1024xbf16, #tpu.memory_space<vmem>>, vector<8x1024xbf16>
    %c0_1 = arith.constant 0 : index
    %c0_2 = arith.constant 0 : index
    %1 = vector.load %arg2[%c0_1, %c0_2] : memref<1024x512xbf16, #tpu.memory_space<vmem>>, vector<1024x512xbf16>
    %cst = arith.constant dense<0.000000e+00> : vector<8x512xf32>
    %2 = tpu.matmul %0, %1, %cst {dimension_numbers = #tpu.dot_dimension_numbers<[1], [0], [0], [1], [0, 0, 1, 1], [], []>} : vector<8x1024xbf16>, vector<1024x512xbf16>, vector<8x512xf32> -> vector<8x512xf32>
    %c0_3 = arith.constant 0 : index
    %c0_4 = arith.constant 0 : index
    %3 = vector.load %arg3[%c0_3, %c0_4] : memref<1x512xf32, #tpu.memory_space<vmem>>, vector<1x512xf32>
    %4 = vector.broadcast %3 : vector<1x512xf32> to vector<8x512xf32>
    %5 = arith.addf %2, %4 : vector<8x512xf32>
    %cst_5 = arith.constant 0.000000e+00 : f32
    %6 = vector.broadcast %cst_5 : f32 to vector<8x512xf32>
    %7 = arith.maximumf %5, %6 : vector<8x512xf32>
    %8 = arith.truncf %7 : vector<8x512xf32> to vector<8x512xbf16>
    %c0_6 = arith.constant 0 : index
    %c0_7 = arith.constant 0 : index
    %9 = vector.load %arg4[%c0_6, %c0_7] : memref<512x384xbf16, #tpu.memory_space<vmem>>, vector<512x384xbf16>
    %cst_8 = arith.constant dense<0.000000e+00> : vector<8x384xf32>
    %10 = tpu.matmul %8, %9, %cst_8 {dimension_numbers = #tpu.dot_dimension_numbers<[1], [0], [0], [1], [0, 0, 1, 1], [], []>} : vector<8x512xbf16>, vector<512x384xbf16>, vector<8x384xf32> -> vector<8x384xf32>
    %c0_9 = arith.constant 0 : index
    %c0_10 = arith.constant 0 : index
    %11 = vector.load %arg5[%c0_9, %c0_10] : memref<1x384xf32, #tpu.memory_space<vmem>>, vector<1x384xf32>
    %12 = vector.broadcast %11 : vector<1x384xf32> to vector<8x384xf32>
    %13 = arith.addf %10, %12 : vector<8x384xf32>
    %cst_11 = arith.constant 0.000000e+00 : f32
    %14 = vector.broadcast %cst_11 : f32 to vector<8x384xf32>
    %15 = arith.maximumf %13, %14 : vector<8x384xf32>
    %c0_12 = arith.constant 0 : index
    %c0_13 = arith.constant 0 : index
    %16 = vector.load %arg6[%c0_12, %c0_13] : memref<1x384xf32, #tpu.memory_space<vmem>>, vector<1x384xf32>
    %17 = vector.broadcast %16 : vector<1x384xf32> to vector<8x384xf32>
    %18 = arith.mulf %15, %17 : vector<8x384xf32>
    %cst_14 = arith.constant dense<0.000000e+00> : vector<8xf32>
    %19 = vector.multi_reduction <add>, %18, %cst_14 [1] : vector<8x384xf32> to vector<8xf32>
    %20 = vector.shape_cast %19 : vector<8xf32> to vector<8x1xf32>
    %c0_15 = arith.constant 0 : index
    %c0_16 = arith.constant 0 : index
    %21 = vector.load %arg7[%c0_15, %c0_16] : memref<8x1xf32, #tpu.memory_space<vmem>>, vector<8x1xf32>
    tpu.vector_store %arg7[%c0_15, %c0_16], %20 {strides = array<i32>} : memref<8x1xf32, #tpu.memory_space<vmem>>, vector<8x1xf32>,
    return
  }
  func.func @transform_0(%arg0: i32) -> (i32, i32) {
    %c0_i32 = arith.constant 0 : i32
    %c0_i32_0 = arith.constant 0 : i32
    return %arg0, %c0_i32 : i32, i32
  }
  func.func @transform_1(%arg0: i32) -> (i32, i32) {
    %c0_i32 = arith.constant 0 : i32
    %c0_i32_0 = arith.constant 0 : i32
    %c0_i32_1 = arith.constant 0 : i32
    return %c0_i32, %c0_i32_0 : i32, i32
  }
  func.func @transform_2(%arg0: i32) -> (i32, i32) {
    %c0_i32 = arith.constant 0 : i32
    %c0_i32_0 = arith.constant 0 : i32
    %c0_i32_1 = arith.constant 0 : i32
    return %c0_i32, %c0_i32_0 : i32, i32
  }
  func.func @transform_3(%arg0: i32) -> (i32, i32) {
    %c0_i32 = arith.constant 0 : i32
    %c0_i32_0 = arith.constant 0 : i32
    %c0_i32_1 = arith.constant 0 : i32
    return %c0_i32, %c0_i32_0 : i32, i32
  }
  func.func @transform_4(%arg0: i32) -> (i32, i32) {
    %c0_i32 = arith.constant 0 : i32
    %c0_i32_0 = arith.constant 0 : i32
    %c0_i32_1 = arith.constant 0 : i32
    return %c0_i32, %c0_i32_0 : i32, i32
  }
  func.func @transform_5(%arg0: i32) -> (i32, i32) {
    %c0_i32 = arith.constant 0 : i32
    %c0_i32_0 = arith.constant 0 : i32
    %c0_i32_1 = arith.constant 0 : i32
    return %c0_i32, %c0_i32_0 : i32, i32
  }
  func.func @transform_6(%arg0: i32) -> (i32, i32) {
    %c0_i32 = arith.constant 0 : i32
    %c0_i32_0 = arith.constant 0 : i32
    return %arg0, %c0_i32 : i32, i32
  }
}

</mosaic_0001>

<llo_original>
// kernel: tpu_custom_call.1
$region0: #{tpu_custom_call.1}
  #allocation0 [shape = 'u32[]', space=smem, size = 0x4, offset = 0x4, fixed_abs, tag = 'smem constant byte address 0x4 - core index']
  #allocation1 [shape = 'u32[72,128]{1,0:T(1,128)}', space=vmem, size = 0x9000, scoped, tag = 'internal scratch']
  %s0 = inlined_call_operand.hbm [shape: bf16[8,1024], index: 0, kind: input, shape index: {}]
  %s1 = inlined_call_operand.hbm [shape: bf16[1024,512], index: 1, kind: input, shape index: {}]
  %s2 = inlined_call_operand.hbm [shape: f32[1,512], index: 2, kind: input, shape index: {}]
  %s3 = inlined_call_operand.hbm [shape: bf16[512,384], index: 3, kind: input, shape index: {}]
  %s4 = inlined_call_operand.vmem [shape: f32[1,384], index: 4, kind: input, shape index: {}]
  %s5 = inlined_call_operand.hbm [shape: f32[1,384], index: 5, kind: input, shape index: {}]
  %s6 = inlined_call_operand.vmem [shape: f32[8,1], index: 6, kind: output, shape index: {}]
  %s7 = sld [smem:[#allocation0]]
  $region54: #{tpu_custom_call.1} parent=0
    _
  %s9 = ssub.s32 1, %s7
  %s10 = scalar_select 0, %s9, %s7
  $region1: #{tpu_custom_call.1} parent=0
    #allocation2 [shape = 'u8[16384]{0}', space=vmem, size = 0x4000, scoped, tag = 'input window, operand 0, single buffered']
    #allocation3 [shape = 's32[1]{0}', space=sflag, size = 0x4, scoped, tag = 'scoped memory for tpu_custom_call.1']
    #allocation4 [shape = 'u8[1048576]{0}', space=vmem, size = 0x100000, scoped, tag = 'input window, operand 1, single buffered']
    #allocation5 [shape = 's32[1]{0}', space=sflag, size = 0x4, scoped, tag = 'scoped memory for tpu_custom_call.1']
    #allocation6 [shape = 'u8[2048]{0}', space=vmem, size = 0x800, scoped, tag = 'input window, operand 2, single buffered']
    #allocation7 [shape = 'u8[393216]{0}', space=vmem, size = 0x60000, scoped, tag = 'input window, operand 3, single buffered']
    #allocation8 [shape = 's32[1]{0}', space=sflag, size = 0x4, scoped, tag = 'scoped memory for tpu_custom_call.1']
    #allocation9 [shape = 'u8[1536]{0}', space=vmem, size = 0x800, scoped, tag = 'input window, operand 5, single buffered']
    %11 = vsyncpa [#allocation3], 0
    %12 = vsyncpa [#allocation5], 0
    %13 = vsyncpa [#allocation8], 0
    // Predicated region
    $region2: #{tpu_custom_call.1} parent=1 // pred_check
      _
    $region3: #{tpu_custom_call.1} parent=1 // pred_check_branch
      %15 = sbr.rel (0) target = $region5
    $region4: #{tpu_custom_call.1} parent=1 // pred_region
      %17 = vsyncadd [#allocation3], 0
      %s19 = sshll.u32 %s0, 4
      %s20 = int_to_ptr.hbm [resolvable:$true] %s19
      %s21 = sshll.u32 [#allocation2], 4
      %s22 = int_to_ptr.vmem [resolvable:$true] %s21
      %24 = dma.hbm_to_vmem [thread:$0]  %s20, 512, %s22, [#allocation3]
    $region5: #{tpu_custom_call.1} parent=1 // pred_fallthru
      _
    // Predicated region
    $region6: #{tpu_custom_call.1} parent=1 // pred_check
      _
    $region7: #{tpu_custom_call.1} parent=1 // pred_check_branch
      %26 = sbr.rel (0) target = $region9
    $region8: #{tpu_custom_call.1} parent=1 // pred_region
      %28 = vsyncadd [#allocation5], 0
      %s29 = sshll.u32 %s1, 4
      %s30 = int_to_ptr.hbm [resolvable:$true] %s29
      %s31 = sshll.u32 [#allocation4], 4
      %s32 = int_to_ptr.vmem [resolvable:$true] %s31
      %37 = dma.hbm_to_vmem [thread:$0]  %s30, 32768, %s32, [#allocation5], 256, 256, 16
    $region9: #{tpu_custom_call.1} parent=1 // pred_fallthru
      _
    // Predicated region
    $region10: #{tpu_custom_call.1} parent=1 // pred_check
      _
    $region11: #{tpu_custom_call.1} parent=1 // pred_check_branch
      %39 = sbr.rel (0) target = $region13
    $region12: #{tpu_custom_call.1} parent=1 // pred_region
      %41 = vsyncadd [#allocation5], 0
      %s43 = sshll.u32 %s2, 4
      %s44 = int_to_ptr.hbm [resolvable:$true] %s43
      %s45 = sshll.u32 [#allocation6], 4
      %s46 = int_to_ptr.vmem [resolvable:$true] %s45
      %48 = dma.hbm_to_vmem [thread:$0]  %s44, 64, %s46, [#allocation5]
    $region13: #{tpu_custom_call.1} parent=1 // pred_fallthru
      _
    // Predicated region
    $region14: #{tpu_custom_call.1} parent=1 // pred_check
      _
    $region15: #{tpu_custom_call.1} parent=1 // pred_check_branch
      %50 = sbr.rel (0) target = $region17
    $region16: #{tpu_custom_call.1} parent=1 // pred_region
      %52 = vsyncadd [#allocation8], 0
      %s53 = sshll.u32 %s3, 4
      %s54 = int_to_ptr.hbm [resolvable:$true] %s53
      %s55 = sshll.u32 [#allocation7], 4
      %s56 = int_to_ptr.vmem [resolvable:$true] %s55
      %61 = dma.hbm_to_vmem [thread:$0]  %s54, 12288, %s56, [#allocation8], 192, 192, 12
    $region17: #{tpu_custom_call.1} parent=1 // pred_fallthru
      _
    // Predicated region
    $region18: #{tpu_custom_call.1} parent=1 // pred_check
      _
    $region19: #{tpu_custom_call.1} parent=1 // pred_check_branch
      %63 = sbr.rel (0) target = $region21
    $region20: #{tpu_custom_call.1} parent=1 // pred_region
      _
    $region21: #{tpu_custom_call.1} parent=1 // pred_fallthru
      _
    // Predicated region
    $region22: #{tpu_custom_call.1} parent=1 // pred_check
      _
    $region23: #{tpu_custom_call.1} parent=1 // pred_check_branch
      %65 = sbr.rel (0) target = $region25
    $region24: #{tpu_custom_call.1} parent=1 // pred_region
      %67 = vsyncadd [#allocation8], 0
      %s69 = sshll.u32 %s5, 4
      %s70 = int_to_ptr.hbm [resolvable:$true] %s69
      %s71 = sshll.u32 [#allocation9], 4
      %s72 = int_to_ptr.vmem [resolvable:$true] %s71
      %74 = dma.hbm_to_vmem [thread:$0]  %s70, 48, %s72, [#allocation8]
    $region25: #{tpu_custom_call.1} parent=1 // pred_fallthru
      _
    // Predicated region
    $region26: #{tpu_custom_call.1} parent=1 // pred_check
      _
    $region27: #{tpu_custom_call.1} parent=1 // pred_check_branch
      %76 = sbr.rel (0) target = $region29
    $region28: #{tpu_custom_call.1} parent=1 // pred_region
      %78 = dma.done [#allocation3], 512
    $region29: #{tpu_custom_call.1} parent=1 // pred_fallthru
      _
    // Predicated region
    $region30: #{tpu_custom_call.1} parent=1 // pred_check
      _
    $region31: #{tpu_custom_call.1} parent=1 // pred_check_branch
      %80 = sbr.rel (0) target = $region33
    $region32: #{tpu_custom_call.1} parent=1 // pred_region
      %82 = dma.done [#allocation5], 32768
    $region33: #{tpu_custom_call.1} parent=1 // pred_fallthru
      _
    // Predicated region
    $region34: #{tpu_custom_call.1} parent=1 // pred_check
      _
    $region35: #{tpu_custom_call.1} parent=1 // pred_check_branch
      %84 = sbr.rel (0) target = $region37
    $region36: #{tpu_custom_call.1} parent=1 // pred_region
      %86 = dma.done [#allocation5], 64
    $region37: #{tpu_custom_call.1} parent=1 // pred_fallthru
      _
    // Predicated region
    $region38: #{tpu_custom_call.1} parent=1 // pred_check
      _
    $region39: #{tpu_custom_call.1} parent=1 // pred_check_branch
      %88 = sbr.rel (0) target = $region41
    $region40: #{tpu_custom_call.1} parent=1 // pred_region
      %90 = dma.done [#allocation8], 12288
    $region41: #{tpu_custom_call.1} parent=1 // pred_fallthru
      _
    // Predicated region
    $region42: #{tpu_custom_call.1} parent=1 // pred_check
      _
    $region43: #{tpu_custom_call.1} parent=1 // pred_check_branch
      %92 = sbr.rel (0) target = $region45
    $region44: #{tpu_custom_call.1} parent=1 // pred_region
      %94 = dma.done [#allocation8], 48
    $region45: #{tpu_custom_call.1} parent=1 // pred_fallthru
      _
    %v95 = vld [vmem:[#allocation2] sm:$0xff]
    %v96 = vld [vmem:[#allocation2 + $0x8] sm:$0xff]
    %v97 = vld [vmem:[#allocation2 + $0x10] sm:$0xff]
    %v98 = vld [vmem:[#allocation2 + $0x18] sm:$0xff]
    %v99 = vld [vmem:[#allocation4] sm:$0xff]
    %v100 = vld [vmem:[#allocation4 + $0x8] sm:$0xff]
    %v101 = vld [vmem:[#allocation4 + $0x10] sm:$0xff]
    %v102 = vld [vmem:[#allocation4 + $0x18] sm:$0xff]
    %v103 = vld [vmem:[#allocation4 + $0x20] sm:$0xff]
    %v104 = vld [vmem:[#allocation4 + $0x28] sm:$0xff]
    %v105 = vld [vmem:[#allocation4 + $0x30] sm:$0xff]
    %v106 = vld [vmem:[#allocation4 + $0x38] sm:$0xff]
    %v107 = vld [vmem:[#allocation4 + $0x40] sm:$0xff]
    %v108 = vld [vmem:[#allocation4 + $0x48] sm:$0xff]
    %v109 = vld [vmem:[#allocation4 + $0x50] sm:$0xff]
    %v110 = vld [vmem:[#allocation4 + $0x58] sm:$0xff]
    %v111 = vld [vmem:[#allocation4 + $0x60] sm:$0xff]
    %v112 = vld [vmem:[#allocation4 + $0x68] sm:$0xff]
    %v113 = vld [vmem:[#allocation4 + $0x70] sm:$0xff]
    %v114 = vld [vmem:[#allocation4 + $0x78] sm:$0xff]
    %v115 = vld [vmem:[#allocation4 + $0x80] sm:$0xff]
    %v116 = vld [vmem:[#allocation4 + $0x88] sm:$0xff]
    %v117 = vld [vmem:[#allocation4 + $0x90] sm:$0xff]
    %v118 = vld [vmem:[#allocation4 + $0x98] sm:$0xff]
    %v119 = vld [vmem:[#allocation4 + $0xa0] sm:$0xff]
    %v120 = vld [vmem:[#allocation4 + $0xa8] sm:$0xff]
    %v121 = vld [vmem:[#allocation4 + $0xb0] sm:$0xff]
    %v122 = vld [vmem:[#allocation4 + $0xb8] sm:$0xff]
    %v123 = vld [vmem:[#allocation4 + $0xc0] sm:$0xff]
    %v124 = vld [vmem:[#allocation4 + $0xc8] sm:$0xff]
    %v125 = vld [vmem:[#allocation4 + $0xd0] sm:$0xff]
    %v126 = vld [vmem:[#allocation4 + $0xd8] sm:$0xff]
    %v127 = vld [vmem:[#allocation4 + $0xe0] sm:$0xff]
    %v128 = vld [vmem:[#allocation4 + $0xe8] sm:$0xff]
    %v129 = vld [vmem:[#allocation4 + $0xf0] sm:$0xff]
    %v130 = vld [vmem:[#allocation4 + $0xf8] sm:$0xff]
    %v131 = vld [vmem:[#allocation4 + $0x100] sm:$0xff]
    %v132 = vld [vmem:[#allocation4 + $0x108] sm:$0xff]
    %v133 = vld [vmem:[#allocation4 + $0x110] sm:$0xff]
    %v134 = vld [vmem:[#allocation4 + $0x118] sm:$0xff]
    %v135 = vld [vmem:[#allocation4 + $0x120] sm:$0xff]
    %v136 = vld [vmem:[#allocation4 + $0x128] sm:$0xff]
    %v137 = vld [vmem:[#allocation4 + $0x130] sm:$0xff]
    %v138 = vld [vmem:[#allocation4 + $0x138] sm:$0xff]
    %v139 = vld [vmem:[#allocation4 + $0x140] sm:$0xff]
    %v140 = vld [vmem:[#allocation4 + $0x148] sm:$0xff]
    %v141 = vld [vmem:[#allocation4 + $0x150] sm:$0xff]
    %v142 = vld [vmem:[#allocation4 + $0x158] sm:$0xff]
    %v143 = vld [vmem:[#allocation4 + $0x160] sm:$0xff]
    %v144 = vld [vmem:[#allocation4 + $0x168] sm:$0xff]
    %v145 = vld [vmem:[#allocation4 + $0x170] sm:$0xff]
    %v146 = vld [vmem:[#allocation4 + $0x178] sm:$0xff]
    %v147 = vld [vmem:[#allocation4 + $0x180] sm:$0xff]
    %v148 = vld [vmem:[#allocation4 + $0x188] sm:$0xff]
    %v149 = vld [vmem:[#allocation4 + $0x190] sm:$0xff]
    %v150 = vld [vmem:[#allocation4 + $0x198] sm:$0xff]
    %v151 = vld [vmem:[#allocation4 + $0x1a0] sm:$0xff]
    %v152 = vld [vmem:[#allocation4 + $0x1a8] sm:$0xff]
    %v153 = vld [vmem:[#allocation4 + $0x1b0] sm:$0xff]
    %v154 = vld [vmem:[#allocation4 + $0x1b8] sm:$0xff]
    %v155 = vld [vmem:[#allocation4 + $0x1c0] sm:$0xff]
    %v156 = vld [vmem:[#allocation4 + $0x1c8] sm:$0xff]
    %v157 = vld [vmem:[#allocation4 + $0x1d0] sm:$0xff]
    %v158 = vld [vmem:[#allocation4 + $0x1d8] sm:$0xff]
    %v159 = vld [vmem:[#allocation4 + $0x1e0] sm:$0xff]
    %v160 = vld [vmem:[#allocation4 + $0x1e8] sm:$0xff]
    %v161 = vld [vmem:[#allocation4 + $0x1f0] sm:$0xff]
    %v162 = vld [vmem:[#allocation4 + $0x1f8] sm:$0xff]
    %v163 = vld [vmem:[#allocation4 + $0x200] sm:$0xff]
    %v164 = vld [vmem:[#allocation4 + $0x208] sm:$0xff]
    %v165 = vld [vmem:[#allocation4 + $0x210] sm:$0xff]
    %v166 = vld [vmem:[#allocation4 + $0x218] sm:$0xff]
    %v167 = vld [vmem:[#allocation4 + $0x220] sm:$0xff]
    %v168 = vld [vmem:[#allocation4 + $0x228] sm:$0xff]
    %v169 = vld [vmem:[#allocation4 + $0x230] sm:$0xff]
    %v170 = vld [vmem:[#allocation4 + $0x238] sm:$0xff]
    %v171 = vld [vmem:[#allocation4 + $0x240] sm:$0xff]
    %v172 = vld [vmem:[#allocation4 + $0x248] sm:$0xff]
    %v173 = vld [vmem:[#allocation4 + $0x250] sm:$0xff]
    %v174 = vld [vmem:[#allocation4 + $0x258] sm:$0xff]
    %v175 = vld [vmem:[#allocation4 + $0x260] sm:$0xff]
    %v176 = vld [vmem:[#allocation4 + $0x268] sm:$0xff]
    %v177 = vld [vmem:[#allocation4 + $0x270] sm:$0xff]
    %v178 = vld [vmem:[#allocation4 + $0x278] sm:$0xff]
    %v179 = vld [vmem:[#allocation4 + $0x280] sm:$0xff]
    %v180 = vld [vmem:[#allocation4 + $0x288] sm:$0xff]
    %v181 = vld [vmem:[#allocation4 + $0x290] sm:$0xff]
    %v182 = vld [vmem:[#allocation4 + $0x298] sm:$0xff]
    %v183 = vld [vmem:[#allocation4 + $0x2a0] sm:$0xff]
    %v184 = vld [vmem:[#allocation4 + $0x2a8] sm:$0xff]
    %v185 = vld [vmem:[#allocation4 + $0x2b0] sm:$0xff]
    %v186 = vld [vmem:[#allocation4 + $0x2b8] sm:$0xff]
    %v187 = vld [vmem:[#allocation4 + $0x2c0] sm:$0xff]
    %v188 = vld [vmem:[#allocation4 + $0x2c8] sm:$0xff]
    %v189 = vld [vmem:[#allocation4 + $0x2d0] sm:$0xff]
    %v190 = vld [vmem:[#allocation4 + $0x2d8] sm:$0xff]
    %v191 = vld [vmem:[#allocation4 + $0x2e0] sm:$0xff]
    %v192 = vld [vmem:[#allocation4 + $0x2e8] sm:$0xff]
    %v193 = vld [vmem:[#allocation4 + $0x2f0] sm:$0xff]
    %v194 = vld [vmem:[#allocation4 + $0x2f8] sm:$0xff]
    %v195 = vld [vmem:[#allocation4 + $0x300] sm:$0xff]
    %v196 = vld [vmem:[#allocation4 + $0x308] sm:$0xff]
    %v197 = vld [vmem:[#allocation4 + $0x310] sm:$0xff]
    %v198 = vld [vmem:[#allocation4 + $0x318] sm:$0xff]
    %v199 = vld [vmem:[#allocation4 + $0x320] sm:$0xff]
    %v200 = vld [vmem:[#allocation4 + $0x328] sm:$0xff]
    %v201 = vld [vmem:[#allocation4 + $0x330] sm:$0xff]
    %v202 = vld [vmem:[#allocation4 + $0x338] sm:$0xff]
    %v203 = vld [vmem:[#allocation4 + $0x340] sm:$0xff]
    %v204 = vld [vmem:[#allocation4 + $0x348] sm:$0xff]
    %v205 = vld [vmem:[#allocation4 + $0x350] sm:$0xff]
    %v206 = vld [vmem:[#allocation4 + $0x358] sm:$0xff]
    %v207 = vld [vmem:[#allocation4 + $0x360] sm:$0xff]
    %v208 = vld [vmem:[#allocation4 + $0x368] sm:$0xff]
    %v209 = vld [vmem:[#allocation4 + $0x370] sm:$0xff]
    %v210 = vld [vmem:[#allocation4 + $0x378] sm:$0xff]
    %v211 = vld [vmem:[#allocation4 + $0x380] sm:$0xff]
    %v212 = vld [vmem:[#allocation4 + $0x388] sm:$0xff]
    %v213 = vld [vmem:[#allocation4 + $0x390] sm:$0xff]
    %v214 = vld [vmem:[#allocation4 + $0x398] sm:$0xff]
    %v215 = vld [vmem:[#allocation4 + $0x3a0] sm:$0xff]
    %v216 = vld [vmem:[#allocation4 + $0x3a8] sm:$0xff]
    %v217 = vld [vmem:[#allocation4 + $0x3b0] sm:$0xff]
    %v218 = vld [vmem:[#allocation4 + $0x3b8] sm:$0xff]
    %v219 = vld [vmem:[#allocation4 + $0x3c0] sm:$0xff]
    %v220 = vld [vmem:[#allocation4 + $0x3c8] sm:$0xff]
    %v221 = vld [vmem:[#allocation4 + $0x3d0] sm:$0xff]
    %v222 = vld [vmem:[#allocation4 + $0x3d8] sm:$0xff]
    %v223 = vld [vmem:[#allocation4 + $0x3e0] sm:$0xff]
    %v224 = vld [vmem:[#allocation4 + $0x3e8] sm:$0xff]
    %v225 = vld [vmem:[#allocation4 + $0x3f0] sm:$0xff]
    %v226 = vld [vmem:[#allocation4 + $0x3f8] sm:$0xff]
    %v227 = vld [vmem:[#allocation4 + $0x400] sm:$0xff]
    %v228 = vld [vmem:[#allocation4 + $0x408] sm:$0xff]
    %v229 = vld [vmem:[#allocation4 + $0x410] sm:$0xff]
    %v230 = vld [vmem:[#allocation4 + $0x418] sm:$0xff]
    %v231 = vld [vmem:[#allocation4 + $0x420] sm:$0xff]
    %v232 = vld [vmem:[#allocation4 + $0x428] sm:$0xff]
    %v233 = vld [vmem:[#allocation4 + $0x430] sm:$0xff]
    %v234 = vld [vmem:[#allocation4 + $0x438] sm:$0xff]
    %v235 = vld [vmem:[#allocation4 + $0x440] sm:$0xff]
    %v236 = vld [vmem:[#allocation4 + $0x448] sm:$0xff]
    %v237 = vld [vmem:[#allocation4 + $0x450] sm:$0xff]
    %v238 = vld [vmem:[#allocation4 + $0x458] sm:$0xff]
    %v239 = vld [vmem:[#allocation4 + $0x460] sm:$0xff]
    %v240 = vld [vmem:[#allocation4 + $0x468] sm:$0xff]
    %v241 = vld [vmem:[#allocation4 + $0x470] sm:$0xff]
    %v242 = vld [vmem:[#allocation4 + $0x478] sm:$0xff]
    %v243 = vld [vmem:[#allocation4 + $0x480] sm:$0xff]
    %v244 = vld [vmem:[#allocation4 + $0x488] sm:$0xff]
    %v245 = vld [vmem:[#allocation4 + $0x490] sm:$0xff]
    %v246 = vld [vmem:[#allocation4 + $0x498] sm:$0xff]
    %v247 = vld [vmem:[#allocation4 + $0x4a0] sm:$0xff]
    %v248 = vld [vmem:[#allocation4 + $0x4a8] sm:$0xff]
    %v249 = vld [vmem:[#allocation4 + $0x4b0] sm:$0xff]
    %v250 = vld [vmem:[#allocation4 + $0x4b8] sm:$0xff]
    %v251 = vld [vmem:[#allocation4 + $0x4c0] sm:$0xff]
    %v252 = vld [vmem:[#allocation4 + $0x4c8] sm:$0xff]
    %v253 = vld [vmem:[#allocation4 + $0x4d0] sm:$0xff]
    %v254 = vld [vmem:[#allocation4 + $0x4d8] sm:$0xff]
    %v255 = vld [vmem:[#allocation4 + $0x4e0] sm:$0xff]
    %v256 = vld [vmem:[#allocation4 + $0x4e8] sm:$0xff]
    %v257 = vld [vmem:[#allocation4 + $0x4f0] sm:$0xff]
    %v258 = vld [vmem:[#allocation4 + $0x4f8] sm:$0xff]
    %v259 = vld [vmem:[#allocation4 + $0x500] sm:$0xff]
    %v260 = vld [vmem:[#allocation4 + $0x508] sm:$0xff]
    %v261 = vld [vmem:[#allocation4 + $0x510] sm:$0xff]
    %v262 = vld [vmem:[#allocation4 + $0x518] sm:$0xff]
    %v263 = vld [vmem:[#allocation4 + $0x520] sm:$0xff]
    %v264 = vld [vmem:[#allocation4 + $0x528] sm:$0xff]
    %v265 = vld [vmem:[#allocation4 + $0x530] sm:$0xff]
    %v266 = vld [vmem:[#allocation4 + $0x538] sm:$0xff]
    %v267 = vld [vmem:[#allocation4 + $0x540] sm:$0xff]
    %v268 = vld [vmem:[#allocation4 + $0x548] sm:$0xff]
    %v269 = vld [vmem:[#allocation4 + $0x550] sm:$0xff]
    %v270 = vld [vmem:[#allocation4 + $0x558] sm:$0xff]
    %v271 = vld [vmem:[#allocation4 + $0x560] sm:$0xff]
    %v272 = vld [vmem:[#allocation4 + $0x568] sm:$0xff]
    %v273 = vld [vmem:[#allocation4 + $0x570] sm:$0xff]
    %v274 = vld [vmem:[#allocation4 + $0x578] sm:$0xff]
    %v275 = vld [vmem:[#allocation4 + $0x580] sm:$0xff]
    %v276 = vld [vmem:[#allocation4 + $0x588] sm:$0xff]
    %v277 = vld [vmem:[#allocation4 + $0x590] sm:$0xff]
    %v278 = vld [vmem:[#allocation4 + $0x598] sm:$0xff]
    %v279 = vld [vmem:[#allocation4 + $0x5a0] sm:$0xff]
    %v280 = vld [vmem:[#allocation4 + $0x5a8] sm:$0xff]
    %v281 = vld [vmem:[#allocation4 + $0x5b0] sm:$0xff]
    %v282 = vld [vmem:[#allocation4 + $0x5b8] sm:$0xff]
    %v283 = vld [vmem:[#allocation4 + $0x5c0] sm:$0xff]
    %v284 = vld [vmem:[#allocation4 + $0x5c8] sm:$0xff]
    %v285 = vld [vmem:[#allocation4 + $0x5d0] sm:$0xff]
    %v286 = vld [vmem:[#allocation4 + $0x5d8] sm:$0xff]
    %v287 = vld [vmem:[#allocation4 + $0x5e0] sm:$0xff]
    %v288 = vld [vmem:[#allocation4 + $0x5e8] sm:$0xff]
    %v289 = vld [vmem:[#allocation4 + $0x5f0] sm:$0xff]
    %v290 = vld [vmem:[#allocation4 + $0x5f8] sm:$0xff]
    %v291 = vld [vmem:[#allocation4 + $0x600] sm:$0xff]
    %v292 = vld [vmem:[#allocation4 + $0x608] sm:$0xff]
    %v293 = vld [vmem:[#allocation4 + $0x610] sm:$0xff]
    %v294 = vld [vmem:[#allocation4 + $0x618] sm:$0xff]
    %v295 = vld [vmem:[#allocation4 + $0x620] sm:$0xff]
    %v296 = vld [vmem:[#allocation4 + $0x628] sm:$0xff]
    %v297 = vld [vmem:[#allocation4 + $0x630] sm:$0xff]
    %v298 = vld [vmem:[#allocation4 + $0x638] sm:$0xff]
    %v299 = vld [vmem:[#allocation4 + $0x640] sm:$0xff]
    %v300 = vld [vmem:[#allocation4 + $0x648] sm:$0xff]
    %v301 = vld [vmem:[#allocation4 + $0x650] sm:$0xff]
    %v302 = vld [vmem:[#allocation4 + $0x658] sm:$0xff]
    %v303 = vld [vmem:[#allocation4 + $0x660] sm:$0xff]
    %v304 = vld [vmem:[#allocation4 + $0x668] sm:$0xff]
    %v305 = vld [vmem:[#allocation4 + $0x670] sm:$0xff]
    %v306 = vld [vmem:[#allocation4 + $0x678] sm:$0xff]
    %v307 = vld [vmem:[#allocation4 + $0x680] sm:$0xff]
    %v308 = vld [vmem:[#allocation4 + $0x688] sm:$0xff]
    %v309 = vld [vmem:[#allocation4 + $0x690] sm:$0xff]
    %v310 = vld [vmem:[#allocation4 + $0x698] sm:$0xff]
    %v311 = vld [vmem:[#allocation4 + $0x6a0] sm:$0xff]
    %v312 = vld [vmem:[#allocation4 + $0x6a8] sm:$0xff]
    %v313 = vld [vmem:[#allocation4 + $0x6b0] sm:$0xff]
    %v314 = vld [vmem:[#allocation4 + $0x6b8] sm:$0xff]
    %v315 = vld [vmem:[#allocation4 + $0x6c0] sm:$0xff]
    %v316 = vld [vmem:[#allocation4 + $0x6c8] sm:$0xff]
    %v317 = vld [vmem:[#allocation4 + $0x6d0] sm:$0xff]
    %v318 = vld [vmem:[#allocation4 + $0x6d8] sm:$0xff]
    %v319 = vld [vmem:[#allocation4 + $0x6e0] sm:$0xff]
    %v320 = vld [vmem:[#allocation4 + $0x6e8] sm:$0xff]
    %v321 = vld [vmem:[#allocation4 + $0x6f0] sm:$0xff]
    %v322 = vld [vmem:[#allocation4 + $0x6f8] sm:$0xff]
    %v323 = vld [vmem:[#allocation4 + $0x700] sm:$0xff]
    %v324 = vld [vmem:[#allocation4 + $0x708] sm:$0xff]
    %v325 = vld [vmem:[#allocation4 + $0x710] sm:$0xff]
    %v326 = vld [vmem:[#allocation4 + $0x718] sm:$0xff]
    %v327 = vld [vmem:[#allocation4 + $0x720] sm:$0xff]
    %v328 = vld [vmem:[#allocation4 + $0x728] sm:$0xff]
    %v329 = vld [vmem:[#allocation4 + $0x730] sm:$0xff]
    %v330 = vld [vmem:[#allocation4 + $0x738] sm:$0xff]
    %v331 = vld [vmem:[#allocation4 + $0x740] sm:$0xff]
    %v332 = vld [vmem:[#allocation4 + $0x748] sm:$0xff]
    %v333 = vld [vmem:[#allocation4 + $0x750] sm:$0xff]
    %v334 = vld [vmem:[#allocation4 + $0x758] sm:$0xff]
    %v335 = vld [vmem:[#allocation4 + $0x760] sm:$0xff]
    %v336 = vld [vmem:[#allocation4 + $0x768] sm:$0xff]
    %v337 = vld [vmem:[#allocation4 + $0x770] sm:$0xff]
    %v338 = vld [vmem:[#allocation4 + $0x778] sm:$0xff]
    %v339 = vld [vmem:[#allocation4 + $0x780] sm:$0xff]
    %v340 = vld [vmem:[#allocation4 + $0x788] sm:$0xff]
    %v341 = vld [vmem:[#allocation4 + $0x790] sm:$0xff]
    %v342 = vld [vmem:[#allocation4 + $0x798] sm:$0xff]
    %v343 = vld [vmem:[#allocation4 + $0x7a0] sm:$0xff]
    %v344 = vld [vmem:[#allocation4 + $0x7a8] sm:$0xff]
    %v345 = vld [vmem:[#allocation4 + $0x7b0] sm:$0xff]
    %v346 = vld [vmem:[#allocation4 + $0x7b8] sm:$0xff]
    %v347 = vld [vmem:[#allocation4 + $0x7c0] sm:$0xff]
    %v348 = vld [vmem:[#allocation4 + $0x7c8] sm:$0xff]
    %v349 = vld [vmem:[#allocation4 + $0x7d0] sm:$0xff]
    %v350 = vld [vmem:[#allocation4 + $0x7d8] sm:$0xff]
    %v351 = vld [vmem:[#allocation4 + $0x7e0] sm:$0xff]
    %v352 = vld [vmem:[#allocation4 + $0x7e8] sm:$0xff]
    %v353 = vld [vmem:[#allocation4 + $0x7f0] sm:$0xff]
    %v354 = vld [vmem:[#allocation4 + $0x7f8] sm:$0xff]
    %v355 = vld [vmem:[#allocation6] sm:$0xf]
    %v357 = vperm.slane %v355, 0
    %v358 = vperm.slane %v355, 1
    %v359 = vperm.slane %v355, 2
    %v360 = vperm.slane %v355, 3
    %v369 = vunpack.c.l.b16 %v95
    %v370 = vunpack.c.h.b16 %v95
    %v371 = vunpack.c.l.b16 %v96
    %v372 = vunpack.c.h.b16 %v96
    %v373 = vunpack.c.l.b16 %v97
    %v374 = vunpack.c.h.b16 %v97
    %v375 = vunpack.c.l.b16 %v98
    %v376 = vunpack.c.h.b16 %v98
    %v377 = vpack.c.b16 %v369, %v369
    %v378 = vpack.c.b16 %v370, %v370
    %v379 = vpack.c.b16 %v371, %v371
    %v380 = vpack.c.b16 %v372, %v372
    %v381 = vpack.c.b16 %v373, %v373
    %v382 = vpack.c.b16 %v374, %v374
    %v383 = vpack.c.b16 %v375, %v375
    %v384 = vpack.c.b16 %v376, %v376
    %v649 = vunpack.c.l.b16 %v99
    %v650 = vunpack.c.h.b16 %v99
    %v651 = vunpack.c.l.b16 %v100
    %v652 = vunpack.c.h.b16 %v100
    %v653 = vunpack.c.l.b16 %v101
    %v654 = vunpack.c.h.b16 %v101
    %v655 = vunpack.c.l.b16 %v102
    %v656 = vunpack.c.h.b16 %v102
    %v657 = vunpack.c.l.b16 %v103
    %v658 = vunpack.c.h.b16 %v103
    %v659 = vunpack.c.l.b16 %v104
    %v660 = vunpack.c.h.b16 %v104
    %v661 = vunpack.c.l.b16 %v105
    %v662 = vunpack.c.h.b16 %v105
    %v663 = vunpack.c.l.b16 %v106
    %v664 = vunpack.c.h.b16 %v106
    %v665 = vunpack.c.l.b16 %v107
    %v666 = vunpack.c.h.b16 %v107
    %v667 = vunpack.c.l.b16 %v108
    %v668 = vunpack.c.h.b16 %v108
    %v669 = vunpack.c.l.b16 %v109
    %v670 = vunpack.c.h.b16 %v109
    %v671 = vunpack.c.l.b16 %v110
    %v672 = vunpack.c.h.b16 %v110
    %v673 = vunpack.c.l.b16 %v111
    %v674 = vunpack.c.h.b16 %v111
    %v675 = vunpack.c.l.b16 %v112
    %v676 = vunpack.c.h.b16 %v112
    %v677 = vunpack.c.l.b16 %v113
    %v678 = vunpack.c.h.b16 %v113
    %v679 = vunpack.c.l.b16 %v114
    %v680 = vunpack.c.h.b16 %v114
    %v681 = vunpack.c.l.b16 %v115
    %v682 = vunpack.c.h.b16 %v115
    %v683 = vunpack.c.l.b16 %v116
    %v684 = vunpack.c.h.b16 %v116
    %v685 = vunpack.c.l.b16 %v117
    %v686 = vunpack.c.h.b16 %v117
    %v687 = vunpack.c.l.b16 %v118
    %v688 = vunpack.c.h.b16 %v118
    %v689 = vunpack.c.l.b16 %v119
    %v690 = vunpack.c.h.b16 %v119
    %v691 = vunpack.c.l.b16 %v120
    %v692 = vunpack.c.h.b16 %v120
    %v693 = vunpack.c.l.b16 %v121
    %v694 = vunpack.c.h.b16 %v121
    %v695 = vunpack.c.l.b16 %v122
    %v696 = vunpack.c.h.b16 %v122
    %v697 = vunpack.c.l.b16 %v123
    %v698 = vunpack.c.h.b16 %v123
    %v699 = vunpack.c.l.b16 %v124
    %v700 = vunpack.c.h.b16 %v124
    %v701 = vunpack.c.l.b16 %v125
    %v702 = vunpack.c.h.b16 %v125
    %v703 = vunpack.c.l.b16 %v126
    %v704 = vunpack.c.h.b16 %v126
    %v705 = vunpack.c.l.b16 %v127
    %v706 = vunpack.c.h.b16 %v127
    %v707 = vunpack.c.l.b16 %v128
    %v708 = vunpack.c.h.b16 %v128
    %v709 = vunpack.c.l.b16 %v129
    %v710 = vunpack.c.h.b16 %v129
    %v711 = vunpack.c.l.b16 %v130
    %v712 = vunpack.c.h.b16 %v130
    %v713 = vunpack.c.l.b16 %v131
    %v714 = vunpack.c.h.b16 %v131
    %v715 = vunpack.c.l.b16 %v132
    %v716 = vunpack.c.h.b16 %v132
    %v717 = vunpack.c.l.b16 %v133
    %v718 = vunpack.c.h.b16 %v133
    %v719 = vunpack.c.l.b16 %v134
    %v720 = vunpack.c.h.b16 %v134
    %v721 = vunpack.c.l.b16 %v135
    %v722 = vunpack.c.h.b16 %v135
    %v723 = vunpack.c.l.b16 %v136
    %v724 = vunpack.c.h.b16 %v136
    %v725 = vunpack.c.l.b16 %v137
    %v726 = vunpack.c.h.b16 %v137
    %v727 = vunpack.c.l.b16 %v138
    %v728 = vunpack.c.h.b16 %v138
    %v729 = vunpack.c.l.b16 %v139
    %v730 = vunpack.c.h.b16 %v139
    %v731 = vunpack.c.l.b16 %v140
    %v732 = vunpack.c.h.b16 %v140
    %v733 = vunpack.c.l.b16 %v141
    %v734 = vunpack.c.h.b16 %v141
    %v735 = vunpack.c.l.b16 %v142
    %v736 = vunpack.c.h.b16 %v142
    %v737 = vunpack.c.l.b16 %v143
    %v738 = vunpack.c.h.b16 %v143
    %v739 = vunpack.c.l.b16 %v144
    %v740 = vunpack.c.h.b16 %v144
    %v741 = vunpack.c.l.b16 %v145
    %v742 = vunpack.c.h.b16 %v145
    %v743 = vunpack.c.l.b16 %v146
    %v744 = vunpack.c.h.b16 %v146
    %v745 = vunpack.c.l.b16 %v147
    %v746 = vunpack.c.h.b16 %v147
    %v747 = vunpack.c.l.b16 %v148
    %v748 = vunpack.c.h.b16 %v148
    %v749 = vunpack.c.l.b16 %v149
    %v750 = vunpack.c.h.b16 %v149
    %v751 = vunpack.c.l.b16 %v150
    %v752 = vunpack.c.h.b16 %v150
    %v753 = vunpack.c.l.b16 %v151
    %v754 = vunpack.c.h.b16 %v151
    %v755 = vunpack.c.l.b16 %v152
    %v756 = vunpack.c.h.b16 %v152
    %v757 = vunpack.c.l.b16 %v153
    %v758 = vunpack.c.h.b16 %v153
    %v759 = vunpack.c.l.b16 %v154
    %v760 = vunpack.c.h.b16 %v154
    %v761 = vunpack.c.l.b16 %v155
    %v762 = vunpack.c.h.b16 %v155
    %v763 = vunpack.c.l.b16 %v156
    %v764 = vunpack.c.h.b16 %v156
    %v765 = vunpack.c.l.b16 %v157
    %v766 = vunpack.c.h.b16 %v157
    %v767 = vunpack.c.l.b16 %v158
    %v768 = vunpack.c.h.b16 %v158
    %v769 = vunpack.c.l.b16 %v159
    %v770 = vunpack.c.h.b16 %v159
    %v771 = vunpack.c.l.b16 %v160
    %v772 = vunpack.c.h.b16 %v160
    %v773 = vunpack.c.l.b16 %v161
    %v774 = vunpack.c.h.b16 %v161
    %v775 = vunpack.c.l.b16 %v162
    %v776 = vunpack.c.h.b16 %v162
    %v777 = vunpack.c.l.b16 %v163
    %v778 = vunpack.c.h.b16 %v163
    %v779 = vunpack.c.l.b16 %v164
    %v780 = vunpack.c.h.b16 %v164
    %v781 = vunpack.c.l.b16 %v165
    %v782 = vunpack.c.h.b16 %v165
    %v783 = vunpack.c.l.b16 %v166
    %v784 = vunpack.c.h.b16 %v166
    %v785 = vunpack.c.l.b16 %v167
    %v786 = vunpack.c.h.b16 %v167
    %v787 = vunpack.c.l.b16 %v168
    %v788 = vunpack.c.h.b16 %v168
    %v789 = vunpack.c.l.b16 %v169
    %v790 = vunpack.c.h.b16 %v169
    %v791 = vunpack.c.l.b16 %v170
    %v792 = vunpack.c.h.b16 %v170
    %v793 = vunpack.c.l.b16 %v171
    %v794 = vunpack.c.h.b16 %v171
    %v795 = vunpack.c.l.b16 %v172
    %v796 = vunpack.c.h.b16 %v172
    %v797 = vunpack.c.l.b16 %v173
    %v798 = vunpack.c.h.b16 %v173
    %v799 = vunpack.c.l.b16 %v174
    %v800 = vunpack.c.h.b16 %v174
    %v801 = vunpack.c.l.b16 %v175
    %v802 = vunpack.c.h.b16 %v175
    %v803 = vunpack.c.l.b16 %v176
    %v804 = vunpack.c.h.b16 %v176
    %v805 = vunpack.c.l.b16 %v177
    %v806 = vunpack.c.h.b16 %v177
    %v807 = vunpack.c.l.b16 %v178
    %v808 = vunpack.c.h.b16 %v178
    %v809 = vunpack.c.l.b16 %v179
    %v810 = vunpack.c.h.b16 %v179
    %v811 = vunpack.c.l.b16 %v180
    %v812 = vunpack.c.h.b16 %v180
    %v813 = vunpack.c.l.b16 %v181
    %v814 = vunpack.c.h.b16 %v181
    %v815 = vunpack.c.l.b16 %v182
    %v816 = vunpack.c.h.b16 %v182
    %v817 = vunpack.c.l.b16 %v183
    %v818 = vunpack.c.h.b16 %v183
    %v819 = vunpack.c.l.b16 %v184
    %v820 = vunpack.c.h.b16 %v184
    %v821 = vunpack.c.l.b16 %v185
    %v822 = vunpack.c.h.b16 %v185
    %v823 = vunpack.c.l.b16 %v186
    %v824 = vunpack.c.h.b16 %v186
    %v825 = vunpack.c.l.b16 %v187
    %v826 = vunpack.c.h.b16 %v187
    %v827 = vunpack.c.l.b16 %v188
    %v828 = vunpack.c.h.b16 %v188
    %v829 = vunpack.c.l.b16 %v189
    %v830 = vunpack.c.h.b16 %v189
    %v831 = vunpack.c.l.b16 %v190
    %v832 = vunpack.c.h.b16 %v190
    %v833 = vunpack.c.l.b16 %v191
    %v834 = vunpack.c.h.b16 %v191
    %v835 = vunpack.c.l.b16 %v192
    %v836 = vunpack.c.h.b16 %v192
    %v837 = vunpack.c.l.b16 %v193
    %v838 = vunpack.c.h.b16 %v193
    %v839 = vunpack.c.l.b16 %v194
    %v840 = vunpack.c.h.b16 %v194
    %v841 = vunpack.c.l.b16 %v195
    %v842 = vunpack.c.h.b16 %v195
    %v843 = vunpack.c.l.b16 %v196
    %v844 = vunpack.c.h.b16 %v196
    %v845 = vunpack.c.l.b16 %v197
    %v846 = vunpack.c.h.b16 %v197
    %v847 = vunpack.c.l.b16 %v198
    %v848 = vunpack.c.h.b16 %v198
    %v849 = vunpack.c.l.b16 %v199
    %v850 = vunpack.c.h.b16 %v199
    %v851 = vunpack.c.l.b16 %v200
    %v852 = vunpack.c.h.b16 %v200
    %v853 = vunpack.c.l.b16 %v201
    %v854 = vunpack.c.h.b16 %v201
    %v855 = vunpack.c.l.b16 %v202
    %v856 = vunpack.c.h.b16 %v202
    %v857 = vunpack.c.l.b16 %v203
    %v858 = vunpack.c.h.b16 %v203
    %v859 = vunpack.c.l.b16 %v204
    %v860 = vunpack.c.h.b16 %v204
    %v861 = vunpack.c.l.b16 %v205
    %v862 = vunpack.c.h.b16 %v205
    %v863 = vunpack.c.l.b16 %v206
    %v864 = vunpack.c.h.b16 %v206
    %v865 = vunpack.c.l.b16 %v207
    %v866 = vunpack.c.h.b16 %v207
    %v867 = vunpack.c.l.b16 %v208
    %v868 = vunpack.c.h.b16 %v208
    %v869 = vunpack.c.l.b16 %v209
    %v870 = vunpack.c.h.b16 %v209
    %v871 = vunpack.c.l.b16 %v210
    %v872 = vunpack.c.h.b16 %v210
    %v873 = vunpack.c.l.b16 %v211
    %v874 = vunpack.c.h.b16 %v211
    %v875 = vunpack.c.l.b16 %v212
    %v876 = vunpack.c.h.b16 %v212
    %v877 = vunpack.c.l.b16 %v213
    %v878 = vunpack.c.h.b16 %v213
    %v879 = vunpack.c.l.b16 %v214
    %v880 = vunpack.c.h.b16 %v214
    %v881 = vunpack.c.l.b16 %v215
    %v882 = vunpack.c.h.b16 %v215
    %v883 = vunpack.c.l.b16 %v216
    %v884 = vunpack.c.h.b16 %v216
    %v885 = vunpack.c.l.b16 %v217
    %v886 = vunpack.c.h.b16 %v217
    %v887 = vunpack.c.l.b16 %v218
    %v888 = vunpack.c.h.b16 %v218
    %v889 = vunpack.c.l.b16 %v219
    %v890 = vunpack.c.h.b16 %v219
    %v891 = vunpack.c.l.b16 %v220
    %v892 = vunpack.c.h.b16 %v220
    %v893 = vunpack.c.l.b16 %v221
    %v894 = vunpack.c.h.b16 %v221
    %v895 = vunpack.c.l.b16 %v222
    %v896 = vunpack.c.h.b16 %v222
    %v897 = vunpack.c.l.b16 %v223
    %v898 = vunpack.c.h.b16 %v223
    %v899 = vunpack.c.l.b16 %v224
    %v900 = vunpack.c.h.b16 %v224
    %v901 = vunpack.c.l.b16 %v225
    %v902 = vunpack.c.h.b16 %v225
    %v903 = vunpack.c.l.b16 %v226
    %v904 = vunpack.c.h.b16 %v226
    %v905 = vunpack.c.l.b16 %v227
    %v906 = vunpack.c.h.b16 %v227
    %v907 = vunpack.c.l.b16 %v228
    %v908 = vunpack.c.h.b16 %v228
    %v909 = vunpack.c.l.b16 %v229
    %v910 = vunpack.c.h.b16 %v229
    %v911 = vunpack.c.l.b16 %v230
    %v912 = vunpack.c.h.b16 %v230
    %v913 = vunpack.c.l.b16 %v231
    %v914 = vunpack.c.h.b16 %v231
    %v915 = vunpack.c.l.b16 %v232
    %v916 = vunpack.c.h.b16 %v232
    %v917 = vunpack.c.l.b16 %v233
    %v918 = vunpack.c.h.b16 %v233
    %v919 = vunpack.c.l.b16 %v234
    %v920 = vunpack.c.h.b16 %v234
    %v921 = vunpack.c.l.b16 %v235
    %v922 = vunpack.c.h.b16 %v235
    %v923 = vunpack.c.l.b16 %v236
    %v924 = vunpack.c.h.b16 %v236
    %v925 = vunpack.c.l.b16 %v237
    %v926 = vunpack.c.h.b16 %v237
    %v927 = vunpack.c.l.b16 %v238
    %v928 = vunpack.c.h.b16 %v238
    %v929 = vunpack.c.l.b16 %v239
    %v930 = vunpack.c.h.b16 %v239
    %v931 = vunpack.c.l.b16 %v240
    %v932 = vunpack.c.h.b16 %v240
    %v933 = vunpack.c.l.b16 %v241
    %v934 = vunpack.c.h.b16 %v241
    %v935 = vunpack.c.l.b16 %v242
    %v936 = vunpack.c.h.b16 %v242
    %v937 = vunpack.c.l.b16 %v243
    %v938 = vunpack.c.h.b16 %v243
    %v939 = vunpack.c.l.b16 %v244
    %v940 = vunpack.c.h.b16 %v244
    %v941 = vunpack.c.l.b16 %v245
    %v942 = vunpack.c.h.b16 %v245
    %v943 = vunpack.c.l.b16 %v246
    %v944 = vunpack.c.h.b16 %v246
    %v945 = vunpack.c.l.b16 %v247
    %v946 = vunpack.c.h.b16 %v247
    %v947 = vunpack.c.l.b16 %v248
    %v948 = vunpack.c.h.b16 %v248
    %v949 = vunpack.c.l.b16 %v249
    %v950 = vunpack.c.h.b16 %v249
    %v951 = vunpack.c.l.b16 %v250
    %v952 = vunpack.c.h.b16 %v250
    %v953 = vunpack.c.l.b16 %v251
    %v954 = vunpack.c.h.b16 %v251
    %v955 = vunpack.c.l.b16 %v252
    %v956 = vunpack.c.h.b16 %v252
    %v957 = vunpack.c.l.b16 %v253
    %v958 = vunpack.c.h.b16 %v253
    %v959 = vunpack.c.l.b16 %v254
    %v960 = vunpack.c.h.b16 %v254
    %v961 = vunpack.c.l.b16 %v255
    %v962 = vunpack.c.h.b16 %v255
    %v963 = vunpack.c.l.b16 %v256
    %v964 = vunpack.c.h.b16 %v256
    %v965 = vunpack.c.l.b16 %v257
    %v966 = vunpack.c.h.b16 %v257
    %v967 = vunpack.c.l.b16 %v258
    %v968 = vunpack.c.h.b16 %v258
    %v969 = vunpack.c.l.b16 %v259
    %v970 = vunpack.c.h.b16 %v259
    %v971 = vunpack.c.l.b16 %v260
    %v972 = vunpack.c.h.b16 %v260
    %v973 = vunpack.c.l.b16 %v261
    %v974 = vunpack.c.h.b16 %v261
    %v975 = vunpack.c.l.b16 %v262
    %v976 = vunpack.c.h.b16 %v262
    %v977 = vunpack.c.l.b16 %v263
    %v978 = vunpack.c.h.b16 %v263
    %v979 = vunpack.c.l.b16 %v264
    %v980 = vunpack.c.h.b16 %v264
    %v981 = vunpack.c.l.b16 %v265
    %v982 = vunpack.c.h.b16 %v265
    %v983 = vunpack.c.l.b16 %v266
    %v984 = vunpack.c.h.b16 %v266
    %v985 = vunpack.c.l.b16 %v267
    %v986 = vunpack.c.h.b16 %v267
    %v987 = vunpack.c.l.b16 %v268
    %v988 = vunpack.c.h.b16 %v268
    %v989 = vunpack.c.l.b16 %v269
    %v990 = vunpack.c.h.b16 %v269
    %v991 = vunpack.c.l.b16 %v270
    %v992 = vunpack.c.h.b16 %v270
    %v993 = vunpack.c.l.b16 %v271
    %v994 = vunpack.c.h.b16 %v271
    %v995 = vunpack.c.l.b16 %v272
    %v996 = vunpack.c.h.b16 %v272
    %v997 = vunpack.c.l.b16 %v273
    %v998 = vunpack.c.h.b16 %v273
    %v999 = vunpack.c.l.b16 %v274
    %v1000 = vunpack.c.h.b16 %v274
    %v1001 = vunpack.c.l.b16 %v275
    %v1002 = vunpack.c.h.b16 %v275
    %v1003 = vunpack.c.l.b16 %v276
    %v1004 = vunpack.c.h.b16 %v276
    %v1005 = vunpack.c.l.b16 %v277
    %v1006 = vunpack.c.h.b16 %v277
    %v1007 = vunpack.c.l.b16 %v278
    %v1008 = vunpack.c.h.b16 %v278
    %v1009 = vunpack.c.l.b16 %v279
    %v1010 = vunpack.c.h.b16 %v279
    %v1011 = vunpack.c.l.b16 %v280
    %v1012 = vunpack.c.h.b16 %v280
    %v1013 = vunpack.c.l.b16 %v281
    %v1014 = vunpack.c.h.b16 %v281
    %v1015 = vunpack.c.l.b16 %v282
    %v1016 = vunpack.c.h.b16 %v282
    %v1017 = vunpack.c.l.b16 %v283
    %v1018 = vunpack.c.h.b16 %v283
    %v1019 = vunpack.c.l.b16 %v284
    %v1020 = vunpack.c.h.b16 %v284
    %v1021 = vunpack.c.l.b16 %v285
    %v1022 = vunpack.c.h.b16 %v285
    %v1023 = vunpack.c.l.b16 %v286
    %v1024 = vunpack.c.h.b16 %v286
    %v1025 = vunpack.c.l.b16 %v287
    %v1026 = vunpack.c.h.b16 %v287
    %v1027 = vunpack.c.l.b16 %v288
    %v1028 = vunpack.c.h.b16 %v288
    %v1029 = vunpack.c.l.b16 %v289
    %v1030 = vunpack.c.h.b16 %v289
    %v1031 = vunpack.c.l.b16 %v290
    %v1032 = vunpack.c.h.b16 %v290
    %v1033 = vunpack.c.l.b16 %v291
    %v1034 = vunpack.c.h.b16 %v291
    %v1035 = vunpack.c.l.b16 %v292
    %v1036 = vunpack.c.h.b16 %v292
    %v1037 = vunpack.c.l.b16 %v293
    %v1038 = vunpack.c.h.b16 %v293
    %v1039 = vunpack.c.l.b16 %v294
    %v1040 = vunpack.c.h.b16 %v294
    %v1041 = vunpack.c.l.b16 %v295
    %v1042 = vunpack.c.h.b16 %v295
    %v1043 = vunpack.c.l.b16 %v296
    %v1044 = vunpack.c.h.b16 %v296
    %v1045 = vunpack.c.l.b16 %v297
    %v1046 = vunpack.c.h.b16 %v297
    %v1047 = vunpack.c.l.b16 %v298
    %v1048 = vunpack.c.h.b16 %v298
    %v1049 = vunpack.c.l.b16 %v299
    %v1050 = vunpack.c.h.b16 %v299
    %v1051 = vunpack.c.l.b16 %v300
    %v1052 = vunpack.c.h.b16 %v300
    %v1053 = vunpack.c.l.b16 %v301
    %v1054 = vunpack.c.h.b16 %v301
    %v1055 = vunpack.c.l.b16 %v302
    %v1056 = vunpack.c.h.b16 %v302
    %v1057 = vunpack.c.l.b16 %v303
    %v1058 = vunpack.c.h.b16 %v303
    %v1059 = vunpack.c.l.b16 %v304
    %v1060 = vunpack.c.h.b16 %v304
    %v1061 = vunpack.c.l.b16 %v305
    %v1062 = vunpack.c.h.b16 %v305
    %v1063 = vunpack.c.l.b16 %v306
    %v1064 = vunpack.c.h.b16 %v306
    %v1065 = vunpack.c.l.b16 %v307
    %v1066 = vunpack.c.h.b16 %v307
    %v1067 = vunpack.c.l.b16 %v308
    %v1068 = vunpack.c.h.b16 %v308
    %v1069 = vunpack.c.l.b16 %v309
    %v1070 = vunpack.c.h.b16 %v309
    %v1071 = vunpack.c.l.b16 %v310
    %v1072 = vunpack.c.h.b16 %v310
    %v1073 = vunpack.c.l.b16 %v311
    %v1074 = vunpack.c.h.b16 %v311
    %v1075 = vunpack.c.l.b16 %v312
    %v1076 = vunpack.c.h.b16 %v312
    %v1077 = vunpack.c.l.b16 %v313
    %v1078 = vunpack.c.h.b16 %v313
    %v1079 = vunpack.c.l.b16 %v314
    %v1080 = vunpack.c.h.b16 %v314
    %v1081 = vunpack.c.l.b16 %v315
    %v1082 = vunpack.c.h.b16 %v315
    %v1083 = vunpack.c.l.b16 %v316
    %v1084 = vunpack.c.h.b16 %v316
    %v1085 = vunpack.c.l.b16 %v317
    %v1086 = vunpack.c.h.b16 %v317
    %v1087 = vunpack.c.l.b16 %v318
    %v1088 = vunpack.c.h.b16 %v318
    %v1089 = vunpack.c.l.b16 %v319
    %v1090 = vunpack.c.h.b16 %v319
    %v1091 = vunpack.c.l.b16 %v320
    %v1092 = vunpack.c.h.b16 %v320
    %v1093 = vunpack.c.l.b16 %v321
    %v1094 = vunpack.c.h.b16 %v321
    %v1095 = vunpack.c.l.b16 %v322
    %v1096 = vunpack.c.h.b16 %v322
    %v1097 = vunpack.c.l.b16 %v323
    %v1098 = vunpack.c.h.b16 %v323
    %v1099 = vunpack.c.l.b16 %v324
    %v1100 = vunpack.c.h.b16 %v324
    %v1101 = vunpack.c.l.b16 %v325
    %v1102 = vunpack.c.h.b16 %v325
    %v1103 = vunpack.c.l.b16 %v326
    %v1104 = vunpack.c.h.b16 %v326
    %v1105 = vunpack.c.l.b16 %v327
    %v1106 = vunpack.c.h.b16 %v327
    %v1107 = vunpack.c.l.b16 %v328
    %v1108 = vunpack.c.h.b16 %v328
    %v1109 = vunpack.c.l.b16 %v329
    %v1110 = vunpack.c.h.b16 %v329
    %v1111 = vunpack.c.l.b16 %v330
    %v1112 = vunpack.c.h.b16 %v330
    %v1113 = vunpack.c.l.b16 %v331
    %v1114 = vunpack.c.h.b16 %v331
    %v1115 = vunpack.c.l.b16 %v332
    %v1116 = vunpack.c.h.b16 %v332
    %v1117 = vunpack.c.l.b16 %v333
    %v1118 = vunpack.c.h.b16 %v333
    %v1119 = vunpack.c.l.b16 %v334
    %v1120 = vunpack.c.h.b16 %v334
    %v1121 = vunpack.c.l.b16 %v335
    %v1122 = vunpack.c.h.b16 %v335
    %v1123 = vunpack.c.l.b16 %v336
    %v1124 = vunpack.c.h.b16 %v336
    %v1125 = vunpack.c.l.b16 %v337
    %v1126 = vunpack.c.h.b16 %v337
    %v1127 = vunpack.c.l.b16 %v338
    %v1128 = vunpack.c.h.b16 %v338
    %v1129 = vunpack.c.l.b16 %v339
    %v1130 = vunpack.c.h.b16 %v339
    %v1131 = vunpack.c.l.b16 %v340
    %v1132 = vunpack.c.h.b16 %v340
    %v1133 = vunpack.c.l.b16 %v341
    %v1134 = vunpack.c.h.b16 %v341
    %v1135 = vunpack.c.l.b16 %v342
    %v1136 = vunpack.c.h.b16 %v342
    %v1137 = vunpack.c.l.b16 %v343
    %v1138 = vunpack.c.h.b16 %v343
    %v1139 = vunpack.c.l.b16 %v344
    %v1140 = vunpack.c.h.b16 %v344
    %v1141 = vunpack.c.l.b16 %v345
    %v1142 = vunpack.c.h.b16 %v345
    %v1143 = vunpack.c.l.b16 %v346
    %v1144 = vunpack.c.h.b16 %v346
    %v1145 = vunpack.c.l.b16 %v347
    %v1146 = vunpack.c.h.b16 %v347
    %v1147 = vunpack.c.l.b16 %v348
    %v1148 = vunpack.c.h.b16 %v348
    %v1149 = vunpack.c.l.b16 %v349
    %v1150 = vunpack.c.h.b16 %v349
    %v1151 = vunpack.c.l.b16 %v350
    %v1152 = vunpack.c.h.b16 %v350
    %v1153 = vunpack.c.l.b16 %v351
    %v1154 = vunpack.c.h.b16 %v351
    %v1155 = vunpack.c.l.b16 %v352
    %v1156 = vunpack.c.h.b16 %v352
    %v1157 = vunpack.c.l.b16 %v353
    %v1158 = vunpack.c.h.b16 %v353
    %v1159 = vunpack.c.l.b16 %v354
    %v1160 = vunpack.c.h.b16 %v354
    %v1161 = vpack.c.b16 %v653, %v649
    %v1162 = vpack.c.b16 %v654, %v650
    %v1163 = vpack.c.b16 %v655, %v651
    %v1164 = vpack.c.b16 %v656, %v652
    %v1165 = vpack.c.b16 %v661, %v657
    %v1166 = vpack.c.b16 %v662, %v658
    %v1167 = vpack.c.b16 %v663, %v659
    %v1168 = vpack.c.b16 %v664, %v660
    %v1169 = vpack.c.b16 %v669, %v665
    %v1170 = vpack.c.b16 %v670, %v666
    %v1171 = vpack.c.b16 %v671, %v667
    %v1172 = vpack.c.b16 %v672, %v668
    %v1173 = vpack.c.b16 %v677, %v673
    %v1174 = vpack.c.b16 %v678, %v674
    %v1175 = vpack.c.b16 %v679, %v675
    %v1176 = vpack.c.b16 %v680, %v676
    %v1177 = vpack.c.b16 %v685, %v681
    %v1178 = vpack.c.b16 %v686, %v682
    %v1179 = vpack.c.b16 %v687, %v683
    %v1180 = vpack.c.b16 %v688, %v684
    %v1181 = vpack.c.b16 %v693, %v689
    %v1182 = vpack.c.b16 %v694, %v690
    %v1183 = vpack.c.b16 %v695, %v691
    %v1184 = vpack.c.b16 %v696, %v692
    %v1185 = vpack.c.b16 %v701, %v697
    %v1186 = vpack.c.b16 %v702, %v698
    %v1187 = vpack.c.b16 %v703, %v699
    %v1188 = vpack.c.b16 %v704, %v700
    %v1189 = vpack.c.b16 %v709, %v705
    %v1190 = vpack.c.b16 %v710, %v706
    %v1191 = vpack.c.b16 %v711, %v707
    %v1192 = vpack.c.b16 %v712, %v708
    %v1193 = vpack.c.b16 %v717, %v713
    %v1194 = vpack.c.b16 %v718, %v714
    %v1195 = vpack.c.b16 %v719, %v715
    %v1196 = vpack.c.b16 %v720, %v716
    %v1197 = vpack.c.b16 %v725, %v721
    %v1198 = vpack.c.b16 %v726, %v722
    %v1199 = vpack.c.b16 %v727, %v723
    %v1200 = vpack.c.b16 %v728, %v724
    %v1201 = vpack.c.b16 %v733, %v729
    %v1202 = vpack.c.b16 %v734, %v730
    %v1203 = vpack.c.b16 %v735, %v731
    %v1204 = vpack.c.b16 %v736, %v732
    %v1205 = vpack.c.b16 %v741, %v737
    %v1206 = vpack.c.b16 %v742, %v738
    %v1207 = vpack.c.b16 %v743, %v739
    %v1208 = vpack.c.b16 %v744, %v740
    %v1209 = vpack.c.b16 %v749, %v745
    %v1210 = vpack.c.b16 %v750, %v746
    %v1211 = vpack.c.b16 %v751, %v747
    %v1212 = vpack.c.b16 %v752, %v748
    %v1213 = vpack.c.b16 %v757, %v753
    %v1214 = vpack.c.b16 %v758, %v754
    %v1215 = vpack.c.b16 %v759, %v755
    %v1216 = vpack.c.b16 %v760, %v756
    %v1217 = vpack.c.b16 %v765, %v761
    %v1218 = vpack.c.b16 %v766, %v762
    %v1219 = vpack.c.b16 %v767, %v763
    %v1220 = vpack.c.b16 %v768, %v764
    %v1221 = vpack.c.b16 %v773, %v769
    %v1222 = vpack.c.b16 %v774, %v770
    %v1223 = vpack.c.b16 %v775, %v771
    %v1224 = vpack.c.b16 %v776, %v772
    %v1225 = vpack.c.b16 %v781, %v777
    %v1226 = vpack.c.b16 %v782, %v778
    %v1227 = vpack.c.b16 %v783, %v779
    %v1228 = vpack.c.b16 %v784, %v780
    %v1229 = vpack.c.b16 %v789, %v785
    %v1230 = vpack.c.b16 %v790, %v786
    %v1231 = vpack.c.b16 %v791, %v787
    %v1232 = vpack.c.b16 %v792, %v788
    %v1233 = vpack.c.b16 %v797, %v793
    %v1234 = vpack.c.b16 %v798, %v794
    %v1235 = vpack.c.b16 %v799, %v795
    %v1236 = vpack.c.b16 %v800, %v796
    %v1237 = vpack.c.b16 %v805, %v801
    %v1238 = vpack.c.b16 %v806, %v802
    %v1239 = vpack.c.b16 %v807, %v803
    %v1240 = vpack.c.b16 %v808, %v804
    %v1241 = vpack.c.b16 %v813, %v809
    %v1242 = vpack.c.b16 %v814, %v810
    %v1243 = vpack.c.b16 %v815, %v811
    %v1244 = vpack.c.b16 %v816, %v812
    %v1245 = vpack.c.b16 %v821, %v817
    %v1246 = vpack.c.b16 %v822, %v818
    %v1247 = vpack.c.b16 %v823, %v819
    %v1248 = vpack.c.b16 %v824, %v820
    %v1249 = vpack.c.b16 %v829, %v825
    %v1250 = vpack.c.b16 %v830, %v826
    %v1251 = vpack.c.b16 %v831, %v827
    %v1252 = vpack.c.b16 %v832, %v828
    %v1253 = vpack.c.b16 %v837, %v833
    %v1254 = vpack.c.b16 %v838, %v834
    %v1255 = vpack.c.b16 %v839, %v835
    %v1256 = vpack.c.b16 %v840, %v836
    %v1257 = vpack.c.b16 %v845, %v841
    %v1258 = vpack.c.b16 %v846, %v842
    %v1259 = vpack.c.b16 %v847, %v843
    %v1260 = vpack.c.b16 %v848, %v844
    %v1261 = vpack.c.b16 %v853, %v849
    %v1262 = vpack.c.b16 %v854, %v850
    %v1263 = vpack.c.b16 %v855, %v851
    %v1264 = vpack.c.b16 %v856, %v852
    %v1265 = vpack.c.b16 %v861, %v857
    %v1266 = vpack.c.b16 %v862, %v858
    %v1267 = vpack.c.b16 %v863, %v859
    %v1268 = vpack.c.b16 %v864, %v860
    %v1269 = vpack.c.b16 %v869, %v865
    %v1270 = vpack.c.b16 %v870, %v866
    %v1271 = vpack.c.b16 %v871, %v867
    %v1272 = vpack.c.b16 %v872, %v868
    %v1273 = vpack.c.b16 %v877, %v873
    %v1274 = vpack.c.b16 %v878, %v874
    %v1275 = vpack.c.b16 %v879, %v875
    %v1276 = vpack.c.b16 %v880, %v876
    %v1277 = vpack.c.b16 %v885, %v881
    %v1278 = vpack.c.b16 %v886, %v882
    %v1279 = vpack.c.b16 %v887, %v883
    %v1280 = vpack.c.b16 %v888, %v884
    %v1281 = vpack.c.b16 %v893, %v889
    %v1282 = vpack.c.b16 %v894, %v890
    %v1283 = vpack.c.b16 %v895, %v891
    %v1284 = vpack.c.b16 %v896, %v892
    %v1285 = vpack.c.b16 %v901, %v897
    %v1286 = vpack.c.b16 %v902, %v898
    %v1287 = vpack.c.b16 %v903, %v899
    %v1288 = vpack.c.b16 %v904, %v900
    %v1289 = vpack.c.b16 %v909, %v905
    %v1290 = vpack.c.b16 %v910, %v906
    %v1291 = vpack.c.b16 %v911, %v907
    %v1292 = vpack.c.b16 %v912, %v908
    %v1293 = vpack.c.b16 %v917, %v913
    %v1294 = vpack.c.b16 %v918, %v914
    %v1295 = vpack.c.b16 %v919, %v915
    %v1296 = vpack.c.b16 %v920, %v916
    %v1297 = vpack.c.b16 %v925, %v921
    %v1298 = vpack.c.b16 %v926, %v922
    %v1299 = vpack.c.b16 %v927, %v923
    %v1300 = vpack.c.b16 %v928, %v924
    %v1301 = vpack.c.b16 %v933, %v929
    %v1302 = vpack.c.b16 %v934, %v930
    %v1303 = vpack.c.b16 %v935, %v931
    %v1304 = vpack.c.b16 %v936, %v932
    %v1305 = vpack.c.b16 %v941, %v937
    %v1306 = vpack.c.b16 %v942, %v938
    %v1307 = vpack.c.b16 %v943, %v939
    %v1308 = vpack.c.b16 %v944, %v940
    %v1309 = vpack.c.b16 %v949, %v945
    %v1310 = vpack.c.b16 %v950, %v946
    %v1311 = vpack.c.b16 %v951, %v947
    %v1312 = vpack.c.b16 %v952, %v948
    %v1313 = vpack.c.b16 %v957, %v953
    %v1314 = vpack.c.b16 %v958, %v954
    %v1315 = vpack.c.b16 %v959, %v955
    %v1316 = vpack.c.b16 %v960, %v956
    %v1317 = vpack.c.b16 %v965, %v961
    %v1318 = vpack.c.b16 %v966, %v962
    %v1319 = vpack.c.b16 %v967, %v963
    %v1320 = vpack.c.b16 %v968, %v964
    %v1321 = vpack.c.b16 %v973, %v969
    %v1322 = vpack.c.b16 %v974, %v970
    %v1323 = vpack.c.b16 %v975, %v971
    %v1324 = vpack.c.b16 %v976, %v972
    %v1325 = vpack.c.b16 %v981, %v977
    %v1326 = vpack.c.b16 %v982, %v978
    %v1327 = vpack.c.b16 %v983, %v979
    %v1328 = vpack.c.b16 %v984, %v980
    %v1329 = vpack.c.b16 %v989, %v985
    %v1330 = vpack.c.b16 %v990, %v986
    %v1331 = vpack.c.b16 %v991, %v987
    %v1332 = vpack.c.b16 %v992, %v988
    %v1333 = vpack.c.b16 %v997, %v993
    %v1334 = vpack.c.b16 %v998, %v994
    %v1335 = vpack.c.b16 %v999, %v995
    %v1336 = vpack.c.b16 %v1000, %v996
    %v1337 = vpack.c.b16 %v1005, %v1001
    %v1338 = vpack.c.b16 %v1006, %v1002
    %v1339 = vpack.c.b16 %v1007, %v1003
    %v1340 = vpack.c.b16 %v1008, %v1004
    %v1341 = vpack.c.b16 %v1013, %v1009
    %v1342 = vpack.c.b16 %v1014, %v1010
    %v1343 = vpack.c.b16 %v1015, %v1011
    %v1344 = vpack.c.b16 %v1016, %v1012
    %v1345 = vpack.c.b16 %v1021, %v1017
    %v1346 = vpack.c.b16 %v1022, %v1018
    %v1347 = vpack.c.b16 %v1023, %v1019
    %v1348 = vpack.c.b16 %v1024, %v1020
    %v1349 = vpack.c.b16 %v1029, %v1025
    %v1350 = vpack.c.b16 %v1030, %v1026
    %v1351 = vpack.c.b16 %v1031, %v1027
    %v1352 = vpack.c.b16 %v1032, %v1028
    %v1353 = vpack.c.b16 %v1037, %v1033
    %v1354 = vpack.c.b16 %v1038, %v1034
    %v1355 = vpack.c.b16 %v1039, %v1035
    %v1356 = vpack.c.b16 %v1040, %v1036
    %v1357 = vpack.c.b16 %v1045, %v1041
    %v1358 = vpack.c.b16 %v1046, %v1042
    %v1359 = vpack.c.b16 %v1047, %v1043
    %v1360 = vpack.c.b16 %v1048, %v1044
    %v1361 = vpack.c.b16 %v1053, %v1049
    %v1362 = vpack.c.b16 %v1054, %v1050
    %v1363 = vpack.c.b16 %v1055, %v1051
    %v1364 = vpack.c.b16 %v1056, %v1052
    %v1365 = vpack.c.b16 %v1061, %v1057
    %v1366 = vpack.c.b16 %v1062, %v1058
    %v1367 = vpack.c.b16 %v1063, %v1059
    %v1368 = vpack.c.b16 %v1064, %v1060
    %v1369 = vpack.c.b16 %v1069, %v1065
    %v1370 = vpack.c.b16 %v1070, %v1066
    %v1371 = vpack.c.b16 %v1071, %v1067
    %v1372 = vpack.c.b16 %v1072, %v1068
    %v1373 = vpack.c.b16 %v1077, %v1073
    %v1374 = vpack.c.b16 %v1078, %v1074
    %v1375 = vpack.c.b16 %v1079, %v1075
    %v1376 = vpack.c.b16 %v1080, %v1076
    %v1377 = vpack.c.b16 %v1085, %v1081
    %v1378 = vpack.c.b16 %v1086, %v1082
    %v1379 = vpack.c.b16 %v1087, %v1083
    %v1380 = vpack.c.b16 %v1088, %v1084
    %v1381 = vpack.c.b16 %v1093, %v1089
    %v1382 = vpack.c.b16 %v1094, %v1090
    %v1383 = vpack.c.b16 %v1095, %v1091
    %v1384 = vpack.c.b16 %v1096, %v1092
    %v1385 = vpack.c.b16 %v1101, %v1097
    %v1386 = vpack.c.b16 %v1102, %v1098
    %v1387 = vpack.c.b16 %v1103, %v1099
    %v1388 = vpack.c.b16 %v1104, %v1100
    %v1389 = vpack.c.b16 %v1109, %v1105
    %v1390 = vpack.c.b16 %v1110, %v1106
    %v1391 = vpack.c.b16 %v1111, %v1107
    %v1392 = vpack.c.b16 %v1112, %v1108
    %v1393 = vpack.c.b16 %v1117, %v1113
    %v1394 = vpack.c.b16 %v1118, %v1114
    %v1395 = vpack.c.b16 %v1119, %v1115
    %v1396 = vpack.c.b16 %v1120, %v1116
    %v1397 = vpack.c.b16 %v1125, %v1121
    %v1398 = vpack.c.b16 %v1126, %v1122
    %v1399 = vpack.c.b16 %v1127, %v1123
    %v1400 = vpack.c.b16 %v1128, %v1124
    %v1401 = vpack.c.b16 %v1133, %v1129
    %v1402 = vpack.c.b16 %v1134, %v1130
    %v1403 = vpack.c.b16 %v1135, %v1131
    %v1404 = vpack.c.b16 %v1136, %v1132
    %v1405 = vpack.c.b16 %v1141, %v1137
    %v1406 = vpack.c.b16 %v1142, %v1138
    %v1407 = vpack.c.b16 %v1143, %v1139
    %v1408 = vpack.c.b16 %v1144, %v1140
    %v1409 = vpack.c.b16 %v1149, %v1145
    %v1410 = vpack.c.b16 %v1150, %v1146
    %v1411 = vpack.c.b16 %v1151, %v1147
    %v1412 = vpack.c.b16 %v1152, %v1148
    %v1413 = vpack.c.b16 %v1157, %v1153
    %v1414 = vpack.c.b16 %v1158, %v1154
    %v1415 = vpack.c.b16 %v1159, %v1155
    %v1416 = vpack.c.b16 %v1160, %v1156
    %1673 = vmatpush.bf16.msra.mxu0 %v1189
    %1674 = vmatpush.bf16.msra.mxu0 %v1185
    %1675 = vmatpush.bf16.msra.mxu0 %v1181
    %1676 = vmatpush.bf16.msra.mxu0 %v1177
    %1677 = vmatpush.bf16.msra.mxu0 %v1173
    %1678 = vmatpush.bf16.msra.mxu0 %v1169
    %1679 = vmatpush.bf16.msra.mxu0 %v1165
    %1680 = vmatpush.bf16.msra.mxu0 %v1161
    %1681 = vmatmul.bf16.gmra.mxu0 %v377
    %v1682 = vpop.f32.mrf.mxu0
    %v1683 = vadd.f32 %v357, %v1682
    %v1684 = vpop.f32.mrf.mxu0
    %1685 = vdwg.mxu0
    %1686 = vmatpush.bf16.msra.mxu0 %v1221
    %1687 = vmatpush.bf16.msra.mxu0 %v1217
    %1688 = vmatpush.bf16.msra.mxu0 %v1213
    %1689 = vmatpush.bf16.msra.mxu0 %v1209
    %1690 = vmatpush.bf16.msra.mxu0 %v1205
    %1691 = vmatpush.bf16.msra.mxu0 %v1201
    %1692 = vmatpush.bf16.msra.mxu0 %v1197
    %1693 = vmatpush.bf16.msra.mxu0 %v1193
    %1694 = vmatmul.bf16.gmra.mxu0 %v378
    %v1695 = vpop.f32.mrf.mxu0
    %v1696 = vadd.f32 %v1683, %v1695
    %v1697 = vpop.f32.mrf.mxu0
    %1698 = vdwg.mxu0
    %1699 = vmatpush.bf16.msra.mxu0 %v1253
    %1700 = vmatpush.bf16.msra.mxu0 %v1249
    %1701 = vmatpush.bf16.msra.mxu0 %v1245
    %1702 = vmatpush.bf16.msra.mxu0 %v1241
    %1703 = vmatpush.bf16.msra.mxu0 %v1237
    %1704 = vmatpush.bf16.msra.mxu0 %v1233
    %1705 = vmatpush.bf16.msra.mxu0 %v1229
    %1706 = vmatpush.bf16.msra.mxu0 %v1225
    %1707 = vmatmul.bf16.gmra.mxu0 %v379
    %v1708 = vpop.f32.mrf.mxu0
    %v1709 = vadd.f32 %v1696, %v1708
    %v1710 = vpop.f32.mrf.mxu0
    %1711 = vdwg.mxu0
    %1712 = vmatpush.bf16.msra.mxu0 %v1285
    %1713 = vmatpush.bf16.msra.mxu0 %v1281
    %1714 = vmatpush.bf16.msra.mxu0 %v1277
    %1715 = vmatpush.bf16.msra.mxu0 %v1273
    %1716 = vmatpush.bf16.msra.mxu0 %v1269
    %1717 = vmatpush.bf16.msra.mxu0 %v1265
    %1718 = vmatpush.bf16.msra.mxu0 %v1261
    %1719 = vmatpush.bf16.msra.mxu0 %v1257
    %1720 = vmatmul.bf16.gmra.mxu0 %v380
    %v1721 = vpop.f32.mrf.mxu0
    %v1722 = vadd.f32 %v1709, %v1721
    %v1723 = vpop.f32.mrf.mxu0
    %1724 = vdwg.mxu0
    %1725 = vmatpush.bf16.msra.mxu0 %v1317
    %1726 = vmatpush.bf16.msra.mxu0 %v1313
    %1727 = vmatpush.bf16.msra.mxu0 %v1309
    %1728 = vmatpush.bf16.msra.mxu0 %v1305
    %1729 = vmatpush.bf16.msra.mxu0 %v1301
    %1730 = vmatpush.bf16.msra.mxu0 %v1297
    %1731 = vmatpush.bf16.msra.mxu0 %v1293
    %1732 = vmatpush.bf16.msra.mxu0 %v1289
    %1733 = vmatmul.bf16.gmra.mxu0 %v381
    %v1734 = vpop.f32.mrf.mxu0
    %v1735 = vadd.f32 %v1722, %v1734
    %v1736 = vpop.f32.mrf.mxu0
    %1737 = vdwg.mxu0
    %1738 = vmatpush.bf16.msra.mxu0 %v1349
    %1739 = vmatpush.bf16.msra.mxu0 %v1345
    %1740 = vmatpush.bf16.msra.mxu0 %v1341
    %1741 = vmatpush.bf16.msra.mxu0 %v1337
    %1742 = vmatpush.bf16.msra.mxu0 %v1333
    %1743 = vmatpush.bf16.msra.mxu0 %v1329
    %1744 = vmatpush.bf16.msra.mxu0 %v1325
    %1745 = vmatpush.bf16.msra.mxu0 %v1321
    %1746 = vmatmul.bf16.gmra.mxu0 %v382
    %v1747 = vpop.f32.mrf.mxu0
    %v1748 = vadd.f32 %v1735, %v1747
    %v1749 = vpop.f32.mrf.mxu0
    %1750 = vdwg.mxu0
    %1751 = vmatpush.bf16.msra.mxu0 %v1381
    %1752 = vmatpush.bf16.msra.mxu0 %v1377
    %1753 = vmatpush.bf16.msra.mxu0 %v1373
    %1754 = vmatpush.bf16.msra.mxu0 %v1369
    %1755 = vmatpush.bf16.msra.mxu0 %v1365
    %1756 = vmatpush.bf16.msra.mxu0 %v1361
    %1757 = vmatpush.bf16.msra.mxu0 %v1357
    %1758 = vmatpush.bf16.msra.mxu0 %v1353
    %1759 = vmatmul.bf16.gmra.mxu0 %v383
    %v1760 = vpop.f32.mrf.mxu0
    %v1761 = vadd.f32 %v1748, %v1760
    %v1762 = vpop.f32.mrf.mxu0
    %1763 = vdwg.mxu0
    %1764 = vmatpush.bf16.msra.mxu0 %v1413
    %1765 = vmatpush.bf16.msra.mxu0 %v1409
    %1766 = vmatpush.bf16.msra.mxu0 %v1405
    %1767 = vmatpush.bf16.msra.mxu0 %v1401
    %1768 = vmatpush.bf16.msra.mxu0 %v1397
    %1769 = vmatpush.bf16.msra.mxu0 %v1393
    %1770 = vmatpush.bf16.msra.mxu0 %v1389
    %1771 = vmatpush.bf16.msra.mxu0 %v1385
    %1772 = vmatmul.bf16.gmra.mxu0 %v384
    %v1773 = vpop.f32.mrf.mxu0
    %v1774 = vadd.f32 %v1761, %v1773
    %v1775 = vpop.f32.mrf.mxu0
    %1776 = vdwg.mxu0
    %1777 = vmatpush.bf16.msra.mxu0 %v1190
    %1778 = vmatpush.bf16.msra.mxu0 %v1186
    %1779 = vmatpush.bf16.msra.mxu0 %v1182
    %1780 = vmatpush.bf16.msra.mxu0 %v1178
    %1781 = vmatpush.bf16.msra.mxu0 %v1174
    %1782 = vmatpush.bf16.msra.mxu0 %v1170
    %1783 = vmatpush.bf16.msra.mxu0 %v1166
    %1784 = vmatpush.bf16.msra.mxu0 %v1162
    %1785 = vmatmul.bf16.gmra.mxu0 %v377
    %v1786 = vpop.f32.mrf.mxu0
    %v1787 = vadd.f32 %v358, %v1786
    %v1788 = vpop.f32.mrf.mxu0
    %1789 = vdwg.mxu0
    %1790 = vmatpush.bf16.msra.mxu0 %v1222
    %1791 = vmatpush.bf16.msra.mxu0 %v1218
    %1792 = vmatpush.bf16.msra.mxu0 %v1214
    %1793 = vmatpush.bf16.msra.mxu0 %v1210
    %1794 = vmatpush.bf16.msra.mxu0 %v1206
    %1795 = vmatpush.bf16.msra.mxu0 %v1202
    %1796 = vmatpush.bf16.msra.mxu0 %v1198
    %1797 = vmatpush.bf16.msra.mxu0 %v1194
    %1798 = vmatmul.bf16.gmra.mxu0 %v378
    %v1799 = vpop.f32.mrf.mxu0
    %v1800 = vadd.f32 %v1787, %v1799
    %v1801 = vpop.f32.mrf.mxu0
    %1802 = vdwg.mxu0
    %1803 = vmatpush.bf16.msra.mxu0 %v1254
    %1804 = vmatpush.bf16.msra.mxu0 %v1250
    %1805 = vmatpush.bf16.msra.mxu0 %v1246
    %1806 = vmatpush.bf16.msra.mxu0 %v1242
    %1807 = vmatpush.bf16.msra.mxu0 %v1238
    %1808 = vmatpush.bf16.msra.mxu0 %v1234
    %1809 = vmatpush.bf16.msra.mxu0 %v1230
    %1810 = vmatpush.bf16.msra.mxu0 %v1226
    %1811 = vmatmul.bf16.gmra.mxu0 %v379
    %v1812 = vpop.f32.mrf.mxu0
    %v1813 = vadd.f32 %v1800, %v1812
    %v1814 = vpop.f32.mrf.mxu0
    %1815 = vdwg.mxu0
    %1816 = vmatpush.bf16.msra.mxu0 %v1286
    %1817 = vmatpush.bf16.msra.mxu0 %v1282
    %1818 = vmatpush.bf16.msra.mxu0 %v1278
    %1819 = vmatpush.bf16.msra.mxu0 %v1274
    %1820 = vmatpush.bf16.msra.mxu0 %v1270
    %1821 = vmatpush.bf16.msra.mxu0 %v1266
    %1822 = vmatpush.bf16.msra.mxu0 %v1262
    %1823 = vmatpush.bf16.msra.mxu0 %v1258
    %1824 = vmatmul.bf16.gmra.mxu0 %v380
    %v1825 = vpop.f32.mrf.mxu0
    %v1826 = vadd.f32 %v1813, %v1825
    %v1827 = vpop.f32.mrf.mxu0
    %1828 = vdwg.mxu0
    %1829 = vmatpush.bf16.msra.mxu0 %v1318
    %1830 = vmatpush.bf16.msra.mxu0 %v1314
    %1831 = vmatpush.bf16.msra.mxu0 %v1310
    %1832 = vmatpush.bf16.msra.mxu0 %v1306
    %1833 = vmatpush.bf16.msra.mxu0 %v1302
    %1834 = vmatpush.bf16.msra.mxu0 %v1298
    %1835 = vmatpush.bf16.msra.mxu0 %v1294
    %1836 = vmatpush.bf16.msra.mxu0 %v1290
    %1837 = vmatmul.bf16.gmra.mxu0 %v381
    %v1838 = vpop.f32.mrf.mxu0
    %v1839 = vadd.f32 %v1826, %v1838
    %v1840 = vpop.f32.mrf.mxu0
    %1841 = vdwg.mxu0
    %1842 = vmatpush.bf16.msra.mxu0 %v1350
    %1843 = vmatpush.bf16.msra.mxu0 %v1346
    %1844 = vmatpush.bf16.msra.mxu0 %v1342
    %1845 = vmatpush.bf16.msra.mxu0 %v1338
    %1846 = vmatpush.bf16.msra.mxu0 %v1334
    %1847 = vmatpush.bf16.msra.mxu0 %v1330
    %1848 = vmatpush.bf16.msra.mxu0 %v1326
    %1849 = vmatpush.bf16.msra.mxu0 %v1322
    %1850 = vmatmul.bf16.gmra.mxu0 %v382
    %v1851 = vpop.f32.mrf.mxu0
    %v1852 = vadd.f32 %v1839, %v1851
    %v1853 = vpop.f32.mrf.mxu0
    %1854 = vdwg.mxu0
    %1855 = vmatpush.bf16.msra.mxu0 %v1382
    %1856 = vmatpush.bf16.msra.mxu0 %v1378
    %1857 = vmatpush.bf16.msra.mxu0 %v1374
    %1858 = vmatpush.bf16.msra.mxu0 %v1370
    %1859 = vmatpush.bf16.msra.mxu0 %v1366
    %1860 = vmatpush.bf16.msra.mxu0 %v1362
    %1861 = vmatpush.bf16.msra.mxu0 %v1358
    %1862 = vmatpush.bf16.msra.mxu0 %v1354
    %1863 = vmatmul.bf16.gmra.mxu0 %v383
    %v1864 = vpop.f32.mrf.mxu0
    %v1865 = vadd.f32 %v1852, %v1864
    %v1866 = vpop.f32.mrf.mxu0
    %1867 = vdwg.mxu0
    %1868 = vmatpush.bf16.msra.mxu0 %v1414
    %1869 = vmatpush.bf16.msra.mxu0 %v1410
    %1870 = vmatpush.bf16.msra.mxu0 %v1406
    %1871 = vmatpush.bf16.msra.mxu0 %v1402
    %1872 = vmatpush.bf16.msra.mxu0 %v1398
    %1873 = vmatpush.bf16.msra.mxu0 %v1394
    %1874 = vmatpush.bf16.msra.mxu0 %v1390
    %1875 = vmatpush.bf16.msra.mxu0 %v1386
    %1876 = vmatmul.bf16.gmra.mxu0 %v384
    %v1877 = vpop.f32.mrf.mxu0
    %v1878 = vadd.f32 %v1865, %v1877
    %v1879 = vpop.f32.mrf.mxu0
    %1880 = vdwg.mxu0
    %1881 = vmatpush.bf16.msra.mxu0 %v1191
    %1882 = vmatpush.bf16.msra.mxu0 %v1187
    %1883 = vmatpush.bf16.msra.mxu0 %v1183
    %1884 = vmatpush.bf16.msra.mxu0 %v1179
    %1885 = vmatpush.bf16.msra.mxu0 %v1175
    %1886 = vmatpush.bf16.msra.mxu0 %v1171
    %1887 = vmatpush.bf16.msra.mxu0 %v1167
    %1888 = vmatpush.bf16.msra.mxu0 %v1163
    %1889 = vmatmul.bf16.gmra.mxu0 %v377
    %v1890 = vpop.f32.mrf.mxu0
    %v1891 = vadd.f32 %v359, %v1890
    %v1892 = vpop.f32.mrf.mxu0
    %1893 = vdwg.mxu0
    %1894 = vmatpush.bf16.msra.mxu0 %v1223
    %1895 = vmatpush.bf16.msra.mxu0 %v1219
    %1896 = vmatpush.bf16.msra.mxu0 %v1215
    %1897 = vmatpush.bf16.msra.mxu0 %v1211
    %1898 = vmatpush.bf16.msra.mxu0 %v1207
    %1899 = vmatpush.bf16.msra.mxu0 %v1203
    %1900 = vmatpush.bf16.msra.mxu0 %v1199
    %1901 = vmatpush.bf16.msra.mxu0 %v1195
    %1902 = vmatmul.bf16.gmra.mxu0 %v378
    %v1903 = vpop.f32.mrf.mxu0
    %v1904 = vadd.f32 %v1891, %v1903
    %v1905 = vpop.f32.mrf.mxu0
    %1906 = vdwg.mxu0
    %1907 = vmatpush.bf16.msra.mxu0 %v1255
    %1908 = vmatpush.bf16.msra.mxu0 %v1251
    %1909 = vmatpush.bf16.msra.mxu0 %v1247
    %1910 = vmatpush.bf16.msra.mxu0 %v1243
    %1911 = vmatpush.bf16.msra.mxu0 %v1239
    %1912 = vmatpush.bf16.msra.mxu0 %v1235
    %1913 = vmatpush.bf16.msra.mxu0 %v1231
    %1914 = vmatpush.bf16.msra.mxu0 %v1227
    %1915 = vmatmul.bf16.gmra.mxu0 %v379
    %v1916 = vpop.f32.mrf.mxu0
    %v1917 = vadd.f32 %v1904, %v1916
    %v1918 = vpop.f32.mrf.mxu0
    %1919 = vdwg.mxu0
    %1920 = vmatpush.bf16.msra.mxu0 %v1287
    %1921 = vmatpush.bf16.msra.mxu0 %v1283
    %1922 = vmatpush.bf16.msra.mxu0 %v1279
    %1923 = vmatpush.bf16.msra.mxu0 %v1275
    %1924 = vmatpush.bf16.msra.mxu0 %v1271
    %1925 = vmatpush.bf16.msra.mxu0 %v1267
    %1926 = vmatpush.bf16.msra.mxu0 %v1263
    %1927 = vmatpush.bf16.msra.mxu0 %v1259
    %1928 = vmatmul.bf16.gmra.mxu0 %v380
    %v1929 = vpop.f32.mrf.mxu0
    %v1930 = vadd.f32 %v1917, %v1929
    %v1931 = vpop.f32.mrf.mxu0
    %1932 = vdwg.mxu0
    %1933 = vmatpush.bf16.msra.mxu0 %v1319
    %1934 = vmatpush.bf16.msra.mxu0 %v1315
    %1935 = vmatpush.bf16.msra.mxu0 %v1311
    %1936 = vmatpush.bf16.msra.mxu0 %v1307
    %1937 = vmatpush.bf16.msra.mxu0 %v1303
    %1938 = vmatpush.bf16.msra.mxu0 %v1299
    %1939 = vmatpush.bf16.msra.mxu0 %v1295
    %1940 = vmatpush.bf16.msra.mxu0 %v1291
    %1941 = vmatmul.bf16.gmra.mxu0 %v381
    %v1942 = vpop.f32.mrf.mxu0
    %v1943 = vadd.f32 %v1930, %v1942
    %v1944 = vpop.f32.mrf.mxu0
    %1945 = vdwg.mxu0
    %1946 = vmatpush.bf16.msra.mxu0 %v1351
    %1947 = vmatpush.bf16.msra.mxu0 %v1347
    %1948 = vmatpush.bf16.msra.mxu0 %v1343
    %1949 = vmatpush.bf16.msra.mxu0 %v1339
    %1950 = vmatpush.bf16.msra.mxu0 %v1335
    %1951 = vmatpush.bf16.msra.mxu0 %v1331
    %1952 = vmatpush.bf16.msra.mxu0 %v1327
    %1953 = vmatpush.bf16.msra.mxu0 %v1323
    %1954 = vmatmul.bf16.gmra.mxu0 %v382
    %v1955 = vpop.f32.mrf.mxu0
    %v1956 = vadd.f32 %v1943, %v1955
    %v1957 = vpop.f32.mrf.mxu0
    %1958 = vdwg.mxu0
    %1959 = vmatpush.bf16.msra.mxu0 %v1383
    %1960 = vmatpush.bf16.msra.mxu0 %v1379
    %1961 = vmatpush.bf16.msra.mxu0 %v1375
    %1962 = vmatpush.bf16.msra.mxu0 %v1371
    %1963 = vmatpush.bf16.msra.mxu0 %v1367
    %1964 = vmatpush.bf16.msra.mxu0 %v1363
    %1965 = vmatpush.bf16.msra.mxu0 %v1359
    %1966 = vmatpush.bf16.msra.mxu0 %v1355
    %1967 = vmatmul.bf16.gmra.mxu0 %v383
    %v1968 = vpop.f32.mrf.mxu0
    %v1969 = vadd.f32 %v1956, %v1968
    %v1970 = vpop.f32.mrf.mxu0
    %1971 = vdwg.mxu0
    %1972 = vmatpush.bf16.msra.mxu0 %v1415
    %1973 = vmatpush.bf16.msra.mxu0 %v1411
    %1974 = vmatpush.bf16.msra.mxu0 %v1407
    %1975 = vmatpush.bf16.msra.mxu0 %v1403
    %1976 = vmatpush.bf16.msra.mxu0 %v1399
    %1977 = vmatpush.bf16.msra.mxu0 %v1395
    %1978 = vmatpush.bf16.msra.mxu0 %v1391
    %1979 = vmatpush.bf16.msra.mxu0 %v1387
    %1980 = vmatmul.bf16.gmra.mxu0 %v384
    %v1981 = vpop.f32.mrf.mxu0
    %v1982 = vadd.f32 %v1969, %v1981
    %v1983 = vpop.f32.mrf.mxu0
    %1984 = vdwg.mxu0
    %1985 = vmatpush.bf16.msra.mxu0 %v1192
    %1986 = vmatpush.bf16.msra.mxu0 %v1188
    %1987 = vmatpush.bf16.msra.mxu0 %v1184
    %1988 = vmatpush.bf16.msra.mxu0 %v1180
    %1989 = vmatpush.bf16.msra.mxu0 %v1176
    %1990 = vmatpush.bf16.msra.mxu0 %v1172
    %1991 = vmatpush.bf16.msra.mxu0 %v1168
    %1992 = vmatpush.bf16.msra.mxu0 %v1164
    %1993 = vmatmul.bf16.gmra.mxu0 %v377
    %v1994 = vpop.f32.mrf.mxu0
    %v1995 = vadd.f32 %v360, %v1994
    %v1996 = vpop.f32.mrf.mxu0
    %1997 = vdwg.mxu0
    %1998 = vmatpush.bf16.msra.mxu0 %v1224
    %1999 = vmatpush.bf16.msra.mxu0 %v1220
    %2000 = vmatpush.bf16.msra.mxu0 %v1216
    %2001 = vmatpush.bf16.msra.mxu0 %v1212
    %2002 = vmatpush.bf16.msra.mxu0 %v1208
    %2003 = vmatpush.bf16.msra.mxu0 %v1204
    %2004 = vmatpush.bf16.msra.mxu0 %v1200
    %2005 = vmatpush.bf16.msra.mxu0 %v1196
    %2006 = vmatmul.bf16.gmra.mxu0 %v378
    %v2007 = vpop.f32.mrf.mxu0
    %v2008 = vadd.f32 %v1995, %v2007
    %v2009 = vpop.f32.mrf.mxu0
    %2010 = vdwg.mxu0
    %2011 = vmatpush.bf16.msra.mxu0 %v1256
    %2012 = vmatpush.bf16.msra.mxu0 %v1252
    %2013 = vmatpush.bf16.msra.mxu0 %v1248
    %2014 = vmatpush.bf16.msra.mxu0 %v1244
    %2015 = vmatpush.bf16.msra.mxu0 %v1240
    %2016 = vmatpush.bf16.msra.mxu0 %v1236
    %2017 = vmatpush.bf16.msra.mxu0 %v1232
    %2018 = vmatpush.bf16.msra.mxu0 %v1228
    %2019 = vmatmul.bf16.gmra.mxu0 %v379
    %v2020 = vpop.f32.mrf.mxu0
    %v2021 = vadd.f32 %v2008, %v2020
    %v2022 = vpop.f32.mrf.mxu0
    %2023 = vdwg.mxu0
    %2024 = vmatpush.bf16.msra.mxu0 %v1288
    %2025 = vmatpush.bf16.msra.mxu0 %v1284
    %2026 = vmatpush.bf16.msra.mxu0 %v1280
    %2027 = vmatpush.bf16.msra.mxu0 %v1276
    %2028 = vmatpush.bf16.msra.mxu0 %v1272
    %2029 = vmatpush.bf16.msra.mxu0 %v1268
    %2030 = vmatpush.bf16.msra.mxu0 %v1264
    %2031 = vmatpush.bf16.msra.mxu0 %v1260
    %2032 = vmatmul.bf16.gmra.mxu0 %v380
    %v2033 = vpop.f32.mrf.mxu0
    %v2034 = vadd.f32 %v2021, %v2033
    %v2035 = vpop.f32.mrf.mxu0
    %2036 = vdwg.mxu0
    %2037 = vmatpush.bf16.msra.mxu0 %v1320
    %2038 = vmatpush.bf16.msra.mxu0 %v1316
    %2039 = vmatpush.bf16.msra.mxu0 %v1312
    %2040 = vmatpush.bf16.msra.mxu0 %v1308
    %2041 = vmatpush.bf16.msra.mxu0 %v1304
    %2042 = vmatpush.bf16.msra.mxu0 %v1300
    %2043 = vmatpush.bf16.msra.mxu0 %v1296
    %2044 = vmatpush.bf16.msra.mxu0 %v1292
    %2045 = vmatmul.bf16.gmra.mxu0 %v381
    %v2046 = vpop.f32.mrf.mxu0
    %v2047 = vadd.f32 %v2034, %v2046
    %v2048 = vpop.f32.mrf.mxu0
    %2049 = vdwg.mxu0
    %2050 = vmatpush.bf16.msra.mxu0 %v1352
    %2051 = vmatpush.bf16.msra.mxu0 %v1348
    %2052 = vmatpush.bf16.msra.mxu0 %v1344
    %2053 = vmatpush.bf16.msra.mxu0 %v1340
    %2054 = vmatpush.bf16.msra.mxu0 %v1336
    %2055 = vmatpush.bf16.msra.mxu0 %v1332
    %2056 = vmatpush.bf16.msra.mxu0 %v1328
    %2057 = vmatpush.bf16.msra.mxu0 %v1324
    %2058 = vmatmul.bf16.gmra.mxu0 %v382
    %v2059 = vpop.f32.mrf.mxu0
    %v2060 = vadd.f32 %v2047, %v2059
    %v2061 = vpop.f32.mrf.mxu0
    %2062 = vdwg.mxu0
    %2063 = vmatpush.bf16.msra.mxu0 %v1384
    %2064 = vmatpush.bf16.msra.mxu0 %v1380
    %2065 = vmatpush.bf16.msra.mxu0 %v1376
    %2066 = vmatpush.bf16.msra.mxu0 %v1372
    %2067 = vmatpush.bf16.msra.mxu0 %v1368
    %2068 = vmatpush.bf16.msra.mxu0 %v1364
    %2069 = vmatpush.bf16.msra.mxu0 %v1360
    %2070 = vmatpush.bf16.msra.mxu0 %v1356
    %2071 = vmatmul.bf16.gmra.mxu0 %v383
    %v2072 = vpop.f32.mrf.mxu0
    %v2073 = vadd.f32 %v2060, %v2072
    %v2074 = vpop.f32.mrf.mxu0
    %2075 = vdwg.mxu0
    %2076 = vmatpush.bf16.msra.mxu0 %v1416
    %2077 = vmatpush.bf16.msra.mxu0 %v1412
    %2078 = vmatpush.bf16.msra.mxu0 %v1408
    %2079 = vmatpush.bf16.msra.mxu0 %v1404
    %2080 = vmatpush.bf16.msra.mxu0 %v1400
    %2081 = vmatpush.bf16.msra.mxu0 %v1396
    %2082 = vmatpush.bf16.msra.mxu0 %v1392
    %2083 = vmatpush.bf16.msra.mxu0 %v1388
    %2084 = vmatmul.bf16.gmra.mxu0 %v384
    %v2085 = vpop.f32.mrf.mxu0
    %v2086 = vadd.f32 %v2073, %v2085
    %v2087 = vpop.f32.mrf.mxu0
    %2088 = vdwg.mxu0
    %v2089 = vmax.f32 %v1774, 0.0
    %v2090 = vmax.f32 %v1878, 0.0
    %v2091 = vmax.f32 %v1982, 0.0
    %v2092 = vmax.f32 %v2086, 0.0
    %v2093 = vpack.c.bf16 %v2089, %v2089
    %v2094 = vpack.c.bf16 %v2090, %v2090
    %v2095 = vpack.c.bf16 %v2091, %v2091
    %v2096 = vpack.c.bf16 %v2092, %v2092
    %v2097 = vld [vmem:[#allocation7] sm:$0xff]
    %v2098 = vld [vmem:[#allocation7 + $0x8] sm:$0xf]
    %v2099 = vld [vmem:[#allocation7 + $0xc] sm:$0xff]
    %v2100 = vld [vmem:[#allocation7 + $0x14] sm:$0xf]
    %v2101 = vld [vmem:[#allocation7 + $0x18] sm:$0xff]
    %v2102 = vld [vmem:[#allocation7 + $0x20] sm:$0xf]
    %v2103 = vld [vmem:[#allocation7 + $0x24] sm:$0xff]
    %v2104 = vld [vmem:[#allocation7 + $0x2c] sm:$0xf]
    %v2105 = vld [vmem:[#allocation7 + $0x30] sm:$0xff]
    %v2106 = vld [vmem:[#allocation7 + $0x38] sm:$0xf]
    %v2107 = vld [vmem:[#allocation7 + $0x3c] sm:$0xff]
    %v2108 = vld [vmem:[#allocation7 + $0x44] sm:$0xf]
    %v2109 = vld [vmem:[#allocation7 + $0x48] sm:$0xff]
    %v2110 = vld [vmem:[#allocation7 + $0x50] sm:$0xf]
    %v2111 = vld [vmem:[#allocation7 + $0x54] sm:$0xff]
    %v2112 = vld [vmem:[#allocation7 + $0x5c] sm:$0xf]
    %v2113 = vld [vmem:[#allocation7 + $0x60] sm:$0xff]
    %v2114 = vld [vmem:[#allocation7 + $0x68] sm:$0xf]
    %v2115 = vld [vmem:[#allocation7 + $0x6c] sm:$0xff]
    %v2116 = vld [vmem:[#allocation7 + $0x74] sm:$0xf]
    %v2117 = vld [vmem:[#allocation7 + $0x78] sm:$0xff]
    %v2118 = vld [vmem:[#allocation7 + $0x80] sm:$0xf]
    %v2119 = vld [vmem:[#allocation7 + $0x84] sm:$0xff]
    %v2120 = vld [vmem:[#allocation7 + $0x8c] sm:$0xf]
    %v2121 = vld [vmem:[#allocation7 + $0x90] sm:$0xff]
    %v2122 = vld [vmem:[#allocation7 + $0x98] sm:$0xf]
    %v2123 = vld [vmem:[#allocation7 + $0x9c] sm:$0xff]
    %v2124 = vld [vmem:[#allocation7 + $0xa4] sm:$0xf]
    %v2125 = vld [vmem:[#allocation7 + $0xa8] sm:$0xff]
    %v2126 = vld [vmem:[#allocation7 + $0xb0] sm:$0xf]
    %v2127 = vld [vmem:[#allocation7 + $0xb4] sm:$0xff]
    %v2128 = vld [vmem:[#allocation7 + $0xbc] sm:$0xf]
    %v2129 = vld [vmem:[#allocation7 + $0xc0] sm:$0xff]
    %v2130 = vld [vmem:[#allocation7 + $0xc8] sm:$0xf]
    %v2131 = vld [vmem:[#allocation7 + $0xcc] sm:$0xff]
    %v2132 = vld [vmem:[#allocation7 + $0xd4] sm:$0xf]
    %v2133 = vld [vmem:[#allocation7 + $0xd8] sm:$0xff]
    %v2134 = vld [vmem:[#allocation7 + $0xe0] sm:$0xf]
    %v2135 = vld [vmem:[#allocation7 + $0xe4] sm:$0xff]
    %v2136 = vld [vmem:[#allocation7 + $0xec] sm:$0xf]
    %v2137 = vld [vmem:[#allocation7 + $0xf0] sm:$0xff]
    %v2138 = vld [vmem:[#allocation7 + $0xf8] sm:$0xf]
    %v2139 = vld [vmem:[#allocation7 + $0xfc] sm:$0xff]
    %v2140 = vld [vmem:[#allocation7 + $0x104] sm:$0xf]
    %v2141 = vld [vmem:[#allocation7 + $0x108] sm:$0xff]
    %v2142 = vld [vmem:[#allocation7 + $0x110] sm:$0xf]
    %v2143 = vld [vmem:[#allocation7 + $0x114] sm:$0xff]
    %v2144 = vld [vmem:[#allocation7 + $0x11c] sm:$0xf]
    %v2145 = vld [vmem:[#allocation7 + $0x120] sm:$0xff]
    %v2146 = vld [vmem:[#allocation7 + $0x128] sm:$0xf]
    %v2147 = vld [vmem:[#allocation7 + $0x12c] sm:$0xff]
    %v2148 = vld [vmem:[#allocation7 + $0x134] sm:$0xf]
    %v2149 = vld [vmem:[#allocation7 + $0x138] sm:$0xff]
    %v2150 = vld [vmem:[#allocation7 + $0x140] sm:$0xf]
    %v2151 = vld [vmem:[#allocation7 + $0x144] sm:$0xff]
    %v2152 = vld [vmem:[#allocation7 + $0x14c] sm:$0xf]
    %v2153 = vld [vmem:[#allocation7 + $0x150] sm:$0xff]
    %v2154 = vld [vmem:[#allocation7 + $0x158] sm:$0xf]
    %v2155 = vld [vmem:[#allocation7 + $0x15c] sm:$0xff]
    %v2156 = vld [vmem:[#allocation7 + $0x164] sm:$0xf]
    %v2157 = vld [vmem:[#allocation7 + $0x168] sm:$0xff]
    %v2158 = vld [vmem:[#allocation7 + $0x170] sm:$0xf]
    %v2159 = vld [vmem:[#allocation7 + $0x174] sm:$0xff]
    %v2160 = vld [vmem:[#allocation7 + $0x17c] sm:$0xf]
    %v2161 = vld [vmem:[#allocation7 + $0x180] sm:$0xff]
    %v2162 = vld [vmem:[#allocation7 + $0x188] sm:$0xf]
    %v2163 = vld [vmem:[#allocation7 + $0x18c] sm:$0xff]
    %v2164 = vld [vmem:[#allocation7 + $0x194] sm:$0xf]
    %v2165 = vld [vmem:[#allocation7 + $0x198] sm:$0xff]
    %v2166 = vld [vmem:[#allocation7 + $0x1a0] sm:$0xf]
    %v2167 = vld [vmem:[#allocation7 + $0x1a4] sm:$0xff]
    %v2168 = vld [vmem:[#allocation7 + $0x1ac] sm:$0xf]
    %v2169 = vld [vmem:[#allocation7 + $0x1b0] sm:$0xff]
    %v2170 = vld [vmem:[#allocation7 + $0x1b8] sm:$0xf]
    %v2171 = vld [vmem:[#allocation7 + $0x1bc] sm:$0xff]
    %v2172 = vld [vmem:[#allocation7 + $0x1c4] sm:$0xf]
    %v2173 = vld [vmem:[#allocation7 + $0x1c8] sm:$0xff]
    %v2174 = vld [vmem:[#allocation7 + $0x1d0] sm:$0xf]
    %v2175 = vld [vmem:[#allocation7 + $0x1d4] sm:$0xff]
    %v2176 = vld [vmem:[#allocation7 + $0x1dc] sm:$0xf]
    %v2177 = vld [vmem:[#allocation7 + $0x1e0] sm:$0xff]
    %v2178 = vld [vmem:[#allocation7 + $0x1e8] sm:$0xf]
    %v2179 = vld [vmem:[#allocation7 + $0x1ec] sm:$0xff]
    %v2180 = vld [vmem:[#allocation7 + $0x1f4] sm:$0xf]
    %v2181 = vld [vmem:[#allocation7 + $0x1f8] sm:$0xff]
    %v2182 = vld [vmem:[#allocation7 + $0x200] sm:$0xf]
    %v2183 = vld [vmem:[#allocation7 + $0x204] sm:$0xff]
    %v2184 = vld [vmem:[#allocation7 + $0x20c] sm:$0xf]
    %v2185 = vld [vmem:[#allocation7 + $0x210] sm:$0xff]
    %v2186 = vld [vmem:[#allocation7 + $0x218] sm:$0xf]
    %v2187 = vld [vmem:[#allocation7 + $0x21c] sm:$0xff]
    %v2188 = vld [vmem:[#allocation7 + $0x224] sm:$0xf]
    %v2189 = vld [vmem:[#allocation7 + $0x228] sm:$0xff]
    %v2190 = vld [vmem:[#allocation7 + $0x230] sm:$0xf]
    %v2191 = vld [vmem:[#allocation7 + $0x234] sm:$0xff]
    %v2192 = vld [vmem:[#allocation7 + $0x23c] sm:$0xf]
    %v2193 = vld [vmem:[#allocation7 + $0x240] sm:$0xff]
    %v2194 = vld [vmem:[#allocation7 + $0x248] sm:$0xf]
    %v2195 = vld [vmem:[#allocation7 + $0x24c] sm:$0xff]
    %v2196 = vld [vmem:[#allocation7 + $0x254] sm:$0xf]
    %v2197 = vld [vmem:[#allocation7 + $0x258] sm:$0xff]
    %v2198 = vld [vmem:[#allocation7 + $0x260] sm:$0xf]
    %v2199 = vld [vmem:[#allocation7 + $0x264] sm:$0xff]
    %v2200 = vld [vmem:[#allocation7 + $0x26c] sm:$0xf]
    %v2201 = vld [vmem:[#allocation7 + $0x270] sm:$0xff]
    %v2202 = vld [vmem:[#allocation7 + $0x278] sm:$0xf]
    %v2203 = vld [vmem:[#allocation7 + $0x27c] sm:$0xff]
    %v2204 = vld [vmem:[#allocation7 + $0x284] sm:$0xf]
    %v2205 = vld [vmem:[#allocation7 + $0x288] sm:$0xff]
    %v2206 = vld [vmem:[#allocation7 + $0x290] sm:$0xf]
    %v2207 = vld [vmem:[#allocation7 + $0x294] sm:$0xff]
    %v2208 = vld [vmem:[#allocation7 + $0x29c] sm:$0xf]
    %v2209 = vld [vmem:[#allocation7 + $0x2a0] sm:$0xff]
    %v2210 = vld [vmem:[#allocation7 + $0x2a8] sm:$0xf]
    %v2211 = vld [vmem:[#allocation7 + $0x2ac] sm:$0xff]
    %v2212 = vld [vmem:[#allocation7 + $0x2b4] sm:$0xf]
    %v2213 = vld [vmem:[#allocation7 + $0x2b8] sm:$0xff]
    %v2214 = vld [vmem:[#allocation7 + $0x2c0] sm:$0xf]
    %v2215 = vld [vmem:[#allocation7 + $0x2c4] sm:$0xff]
    %v2216 = vld [vmem:[#allocation7 + $0x2cc] sm:$0xf]
    %v2217 = vld [vmem:[#allocation7 + $0x2d0] sm:$0xff]
    %v2218 = vld [vmem:[#allocation7 + $0x2d8] sm:$0xf]
    %v2219 = vld [vmem:[#allocation7 + $0x2dc] sm:$0xff]
    %v2220 = vld [vmem:[#allocation7 + $0x2e4] sm:$0xf]
    %v2221 = vld [vmem:[#allocation7 + $0x2e8] sm:$0xff]
    %v2222 = vld [vmem:[#allocation7 + $0x2f0] sm:$0xf]
    %v2223 = vld [vmem:[#allocation7 + $0x2f4] sm:$0xff]
    %v2224 = vld [vmem:[#allocation7 + $0x2fc] sm:$0xf]
    %v2225 = vld [vmem:[%s4] sm:$0x7]
    %v2227 = vperm.slane %v2225, 0
    %v2228 = vperm.slane %v2225, 1
    %v2229 = vperm.slane %v2225, 2
    %v2361 = vunpack.c.l.b16 %v2097
    %v2362 = vunpack.c.h.b16 %v2097
    %v2363 = vunpack.c.l.b16 %v2098
    %v2364 = vunpack.c.l.b16 %v2099
    %v2365 = vunpack.c.h.b16 %v2099
    %v2366 = vunpack.c.l.b16 %v2100
    %v2367 = vunpack.c.l.b16 %v2101
    %v2368 = vunpack.c.h.b16 %v2101
    %v2369 = vunpack.c.l.b16 %v2102
    %v2370 = vunpack.c.l.b16 %v2103
    %v2371 = vunpack.c.h.b16 %v2103
    %v2372 = vunpack.c.l.b16 %v2104
    %v2373 = vunpack.c.l.b16 %v2105
    %v2374 = vunpack.c.h.b16 %v2105
    %v2375 = vunpack.c.l.b16 %v2106
    %v2376 = vunpack.c.l.b16 %v2107
    %v2377 = vunpack.c.h.b16 %v2107
    %v2378 = vunpack.c.l.b16 %v2108
    %v2379 = vunpack.c.l.b16 %v2109
    %v2380 = vunpack.c.h.b16 %v2109
    %v2381 = vunpack.c.l.b16 %v2110
    %v2382 = vunpack.c.l.b16 %v2111
    %v2383 = vunpack.c.h.b16 %v2111
    %v2384 = vunpack.c.l.b16 %v2112
    %v2385 = vunpack.c.l.b16 %v2113
    %v2386 = vunpack.c.h.b16 %v2113
    %v2387 = vunpack.c.l.b16 %v2114
    %v2388 = vunpack.c.l.b16 %v2115
    %v2389 = vunpack.c.h.b16 %v2115
    %v2390 = vunpack.c.l.b16 %v2116
    %v2391 = vunpack.c.l.b16 %v2117
    %v2392 = vunpack.c.h.b16 %v2117
    %v2393 = vunpack.c.l.b16 %v2118
    %v2394 = vunpack.c.l.b16 %v2119
    %v2395 = vunpack.c.h.b16 %v2119
    %v2396 = vunpack.c.l.b16 %v2120
    %v2397 = vunpack.c.l.b16 %v2121
    %v2398 = vunpack.c.h.b16 %v2121
    %v2399 = vunpack.c.l.b16 %v2122
    %v2400 = vunpack.c.l.b16 %v2123
    %v2401 = vunpack.c.h.b16 %v2123
    %v2402 = vunpack.c.l.b16 %v2124
    %v2403 = vunpack.c.l.b16 %v2125
    %v2404 = vunpack.c.h.b16 %v2125
    %v2405 = vunpack.c.l.b16 %v2126
    %v2406 = vunpack.c.l.b16 %v2127
    %v2407 = vunpack.c.h.b16 %v2127
    %v2408 = vunpack.c.l.b16 %v2128
    %v2409 = vunpack.c.l.b16 %v2129
    %v2410 = vunpack.c.h.b16 %v2129
    %v2411 = vunpack.c.l.b16 %v2130
    %v2412 = vunpack.c.l.b16 %v2131
    %v2413 = vunpack.c.h.b16 %v2131
    %v2414 = vunpack.c.l.b16 %v2132
    %v2415 = vunpack.c.l.b16 %v2133
    %v2416 = vunpack.c.h.b16 %v2133
    %v2417 = vunpack.c.l.b16 %v2134
    %v2418 = vunpack.c.l.b16 %v2135
    %v2419 = vunpack.c.h.b16 %v2135
    %v2420 = vunpack.c.l.b16 %v2136
    %v2421 = vunpack.c.l.b16 %v2137
    %v2422 = vunpack.c.h.b16 %v2137
    %v2423 = vunpack.c.l.b16 %v2138
    %v2424 = vunpack.c.l.b16 %v2139
    %v2425 = vunpack.c.h.b16 %v2139
    %v2426 = vunpack.c.l.b16 %v2140
    %v2427 = vunpack.c.l.b16 %v2141
    %v2428 = vunpack.c.h.b16 %v2141
    %v2429 = vunpack.c.l.b16 %v2142
    %v2430 = vunpack.c.l.b16 %v2143
    %v2431 = vunpack.c.h.b16 %v2143
    %v2432 = vunpack.c.l.b16 %v2144
    %v2433 = vunpack.c.l.b16 %v2145
    %v2434 = vunpack.c.h.b16 %v2145
    %v2435 = vunpack.c.l.b16 %v2146
    %v2436 = vunpack.c.l.b16 %v2147
    %v2437 = vunpack.c.h.b16 %v2147
    %v2438 = vunpack.c.l.b16 %v2148
    %v2439 = vunpack.c.l.b16 %v2149
    %v2440 = vunpack.c.h.b16 %v2149
    %v2441 = vunpack.c.l.b16 %v2150
    %v2442 = vunpack.c.l.b16 %v2151
    %v2443 = vunpack.c.h.b16 %v2151
    %v2444 = vunpack.c.l.b16 %v2152
    %v2445 = vunpack.c.l.b16 %v2153
    %v2446 = vunpack.c.h.b16 %v2153
    %v2447 = vunpack.c.l.b16 %v2154
    %v2448 = vunpack.c.l.b16 %v2155
    %v2449 = vunpack.c.h.b16 %v2155
    %v2450 = vunpack.c.l.b16 %v2156
    %v2451 = vunpack.c.l.b16 %v2157
    %v2452 = vunpack.c.h.b16 %v2157
    %v2453 = vunpack.c.l.b16 %v2158
    %v2454 = vunpack.c.l.b16 %v2159
    %v2455 = vunpack.c.h.b16 %v2159
    %v2456 = vunpack.c.l.b16 %v2160
    %v2457 = vunpack.c.l.b16 %v2161
    %v2458 = vunpack.c.h.b16 %v2161
    %v2459 = vunpack.c.l.b16 %v2162
    %v2460 = vunpack.c.l.b16 %v2163
    %v2461 = vunpack.c.h.b16 %v2163
    %v2462 = vunpack.c.l.b16 %v2164
    %v2463 = vunpack.c.l.b16 %v2165
    %v2464 = vunpack.c.h.b16 %v2165
    %v2465 = vunpack.c.l.b16 %v2166
    %v2466 = vunpack.c.l.b16 %v2167
    %v2467 = vunpack.c.h.b16 %v2167
    %v2468 = vunpack.c.l.b16 %v2168
    %v2469 = vunpack.c.l.b16 %v2169
    %v2470 = vunpack.c.h.b16 %v2169
    %v2471 = vunpack.c.l.b16 %v2170
    %v2472 = vunpack.c.l.b16 %v2171
    %v2473 = vunpack.c.h.b16 %v2171
    %v2474 = vunpack.c.l.b16 %v2172
    %v2475 = vunpack.c.l.b16 %v2173
    %v2476 = vunpack.c.h.b16 %v2173
    %v2477 = vunpack.c.l.b16 %v2174
    %v2478 = vunpack.c.l.b16 %v2175
    %v2479 = vunpack.c.h.b16 %v2175
    %v2480 = vunpack.c.l.b16 %v2176
    %v2481 = vunpack.c.l.b16 %v2177
    %v2482 = vunpack.c.h.b16 %v2177
    %v2483 = vunpack.c.l.b16 %v2178
    %v2484 = vunpack.c.l.b16 %v2179
    %v2485 = vunpack.c.h.b16 %v2179
    %v2486 = vunpack.c.l.b16 %v2180
    %v2487 = vunpack.c.l.b16 %v2181
    %v2488 = vunpack.c.h.b16 %v2181
    %v2489 = vunpack.c.l.b16 %v2182
    %v2490 = vunpack.c.l.b16 %v2183
    %v2491 = vunpack.c.h.b16 %v2183
    %v2492 = vunpack.c.l.b16 %v2184
    %v2493 = vunpack.c.l.b16 %v2185
    %v2494 = vunpack.c.h.b16 %v2185
    %v2495 = vunpack.c.l.b16 %v2186
    %v2496 = vunpack.c.l.b16 %v2187
    %v2497 = vunpack.c.h.b16 %v2187
    %v2498 = vunpack.c.l.b16 %v2188
    %v2499 = vunpack.c.l.b16 %v2189
    %v2500 = vunpack.c.h.b16 %v2189
    %v2501 = vunpack.c.l.b16 %v2190
    %v2502 = vunpack.c.l.b16 %v2191
    %v2503 = vunpack.c.h.b16 %v2191
    %v2504 = vunpack.c.l.b16 %v2192
    %v2505 = vunpack.c.l.b16 %v2193
    %v2506 = vunpack.c.h.b16 %v2193
    %v2507 = vunpack.c.l.b16 %v2194
    %v2508 = vunpack.c.l.b16 %v2195
    %v2509 = vunpack.c.h.b16 %v2195
    %v2510 = vunpack.c.l.b16 %v2196
    %v2511 = vunpack.c.l.b16 %v2197
    %v2512 = vunpack.c.h.b16 %v2197
    %v2513 = vunpack.c.l.b16 %v2198
    %v2514 = vunpack.c.l.b16 %v2199
    %v2515 = vunpack.c.h.b16 %v2199
    %v2516 = vunpack.c.l.b16 %v2200
    %v2517 = vunpack.c.l.b16 %v2201
    %v2518 = vunpack.c.h.b16 %v2201
    %v2519 = vunpack.c.l.b16 %v2202
    %v2520 = vunpack.c.l.b16 %v2203
    %v2521 = vunpack.c.h.b16 %v2203
    %v2522 = vunpack.c.l.b16 %v2204
    %v2523 = vunpack.c.l.b16 %v2205
    %v2524 = vunpack.c.h.b16 %v2205
    %v2525 = vunpack.c.l.b16 %v2206
    %v2526 = vunpack.c.l.b16 %v2207
    %v2527 = vunpack.c.h.b16 %v2207
    %v2528 = vunpack.c.l.b16 %v2208
    %v2529 = vunpack.c.l.b16 %v2209
    %v2530 = vunpack.c.h.b16 %v2209
    %v2531 = vunpack.c.l.b16 %v2210
    %v2532 = vunpack.c.l.b16 %v2211
    %v2533 = vunpack.c.h.b16 %v2211
    %v2534 = vunpack.c.l.b16 %v2212
    %v2535 = vunpack.c.l.b16 %v2213
    %v2536 = vunpack.c.h.b16 %v2213
    %v2537 = vunpack.c.l.b16 %v2214
    %v2538 = vunpack.c.l.b16 %v2215
    %v2539 = vunpack.c.h.b16 %v2215
    %v2540 = vunpack.c.l.b16 %v2216
    %v2541 = vunpack.c.l.b16 %v2217
    %v2542 = vunpack.c.h.b16 %v2217
    %v2543 = vunpack.c.l.b16 %v2218
    %v2544 = vunpack.c.l.b16 %v2219
    %v2545 = vunpack.c.h.b16 %v2219
    %v2546 = vunpack.c.l.b16 %v2220
    %v2547 = vunpack.c.l.b16 %v2221
    %v2548 = vunpack.c.h.b16 %v2221
    %v2549 = vunpack.c.l.b16 %v2222
    %v2550 = vunpack.c.l.b16 %v2223
    %v2551 = vunpack.c.h.b16 %v2223
    %v2552 = vunpack.c.l.b16 %v2224
    %v2553 = vpack.c.b16 %v2364, %v2361
    %v2554 = vpack.c.b16 %v2365, %v2362
    %v2555 = vpack.c.b16 %v2366, %v2363
    %v2556 = vpack.c.b16 %v2370, %v2367
    %v2557 = vpack.c.b16 %v2371, %v2368
    %v2558 = vpack.c.b16 %v2372, %v2369
    %v2559 = vpack.c.b16 %v2376, %v2373
    %v2560 = vpack.c.b16 %v2377, %v2374
    %v2561 = vpack.c.b16 %v2378, %v2375
    %v2562 = vpack.c.b16 %v2382, %v2379
    %v2563 = vpack.c.b16 %v2383, %v2380
    %v2564 = vpack.c.b16 %v2384, %v2381
    %v2565 = vpack.c.b16 %v2388, %v2385
    %v2566 = vpack.c.b16 %v2389, %v2386
    %v2567 = vpack.c.b16 %v2390, %v2387
    %v2568 = vpack.c.b16 %v2394, %v2391
    %v2569 = vpack.c.b16 %v2395, %v2392
    %v2570 = vpack.c.b16 %v2396, %v2393
    %v2571 = vpack.c.b16 %v2400, %v2397
    %v2572 = vpack.c.b16 %v2401, %v2398
    %v2573 = vpack.c.b16 %v2402, %v2399
    %v2574 = vpack.c.b16 %v2406, %v2403
    %v2575 = vpack.c.b16 %v2407, %v2404
    %v2576 = vpack.c.b16 %v2408, %v2405
    %v2577 = vpack.c.b16 %v2412, %v2409
    %v2578 = vpack.c.b16 %v2413, %v2410
    %v2579 = vpack.c.b16 %v2414, %v2411
    %v2580 = vpack.c.b16 %v2418, %v2415
    %v2581 = vpack.c.b16 %v2419, %v2416
    %v2582 = vpack.c.b16 %v2420, %v2417
    %v2583 = vpack.c.b16 %v2424, %v2421
    %v2584 = vpack.c.b16 %v2425, %v2422
    %v2585 = vpack.c.b16 %v2426, %v2423
    %v2586 = vpack.c.b16 %v2430, %v2427
    %v2587 = vpack.c.b16 %v2431, %v2428
    %v2588 = vpack.c.b16 %v2432, %v2429
    %v2589 = vpack.c.b16 %v2436, %v2433
    %v2590 = vpack.c.b16 %v2437, %v2434
    %v2591 = vpack.c.b16 %v2438, %v2435
    %v2592 = vpack.c.b16 %v2442, %v2439
    %v2593 = vpack.c.b16 %v2443, %v2440
    %v2594 = vpack.c.b16 %v2444, %v2441
    %v2595 = vpack.c.b16 %v2448, %v2445
    %v2596 = vpack.c.b16 %v2449, %v2446
    %v2597 = vpack.c.b16 %v2450, %v2447
    %v2598 = vpack.c.b16 %v2454, %v2451
    %v2599 = vpack.c.b16 %v2455, %v2452
    %v2600 = vpack.c.b16 %v2456, %v2453
    %v2601 = vpack.c.b16 %v2460, %v2457
    %v2602 = vpack.c.b16 %v2461, %v2458
    %v2603 = vpack.c.b16 %v2462, %v2459
    %v2604 = vpack.c.b16 %v2466, %v2463
    %v2605 = vpack.c.b16 %v2467, %v2464
    %v2606 = vpack.c.b16 %v2468, %v2465
    %v2607 = vpack.c.b16 %v2472, %v2469
    %v2608 = vpack.c.b16 %v2473, %v2470
    %v2609 = vpack.c.b16 %v2474, %v2471
    %v2610 = vpack.c.b16 %v2478, %v2475
    %v2611 = vpack.c.b16 %v2479, %v2476
    %v2612 = vpack.c.b16 %v2480, %v2477
    %v2613 = vpack.c.b16 %v2484, %v2481
    %v2614 = vpack.c.b16 %v2485, %v2482
    %v2615 = vpack.c.b16 %v2486, %v2483
    %v2616 = vpack.c.b16 %v2490, %v2487
    %v2617 = vpack.c.b16 %v2491, %v2488
    %v2618 = vpack.c.b16 %v2492, %v2489
    %v2619 = vpack.c.b16 %v2496, %v2493
    %v2620 = vpack.c.b16 %v2497, %v2494
    %v2621 = vpack.c.b16 %v2498, %v2495
    %v2622 = vpack.c.b16 %v2502, %v2499
    %v2623 = vpack.c.b16 %v2503, %v2500
    %v2624 = vpack.c.b16 %v2504, %v2501
    %v2625 = vpack.c.b16 %v2508, %v2505
    %v2626 = vpack.c.b16 %v2509, %v2506
    %v2627 = vpack.c.b16 %v2510, %v2507
    %v2628 = vpack.c.b16 %v2514, %v2511
    %v2629 = vpack.c.b16 %v2515, %v2512
    %v2630 = vpack.c.b16 %v2516, %v2513
    %v2631 = vpack.c.b16 %v2520, %v2517
    %v2632 = vpack.c.b16 %v2521, %v2518
    %v2633 = vpack.c.b16 %v2522, %v2519
    %v2634 = vpack.c.b16 %v2526, %v2523
    %v2635 = vpack.c.b16 %v2527, %v2524
    %v2636 = vpack.c.b16 %v2528, %v2525
    %v2637 = vpack.c.b16 %v2532, %v2529
    %v2638 = vpack.c.b16 %v2533, %v2530
    %v2639 = vpack.c.b16 %v2534, %v2531
    %v2640 = vpack.c.b16 %v2538, %v2535
    %v2641 = vpack.c.b16 %v2539, %v2536
    %v2642 = vpack.c.b16 %v2540, %v2537
    %v2643 = vpack.c.b16 %v2544, %v2541
    %v2644 = vpack.c.b16 %v2545, %v2542
    %v2645 = vpack.c.b16 %v2546, %v2543
    %v2646 = vpack.c.b16 %v2550, %v2547
    %v2647 = vpack.c.b16 %v2551, %v2548
    %v2648 = vpack.c.b16 %v2552, %v2549
    %2745 = vmatpush.bf16.msra.mxu0 %v2574
    %2746 = vmatpush.bf16.msra.mxu0 %v2571
    %2747 = vmatpush.bf16.msra.mxu0 %v2568
    %2748 = vmatpush.bf16.msra.mxu0 %v2565
    %2749 = vmatpush.bf16.msra.mxu0 %v2562
    %2750 = vmatpush.bf16.msra.mxu0 %v2559
    %2751 = vmatpush.bf16.msra.mxu0 %v2556
    %2752 = vmatpush.bf16.msra.mxu0 %v2553
    %2753 = vmatmul.bf16.gmra.mxu0 %v2093
    %v2754 = vpop.f32.mrf.mxu0
    %v2755 = vadd.f32 %v2227, %v2754
    %v2756 = vpop.f32.mrf.mxu0
    %2757 = vdwg.mxu0
    %2758 = vmatpush.bf16.msra.mxu0 %v2598
    %2759 = vmatpush.bf16.msra.mxu0 %v2595
    %2760 = vmatpush.bf16.msra.mxu0 %v2592
    %2761 = vmatpush.bf16.msra.mxu0 %v2589
    %2762 = vmatpush.bf16.msra.mxu0 %v2586
    %2763 = vmatpush.bf16.msra.mxu0 %v2583
    %2764 = vmatpush.bf16.msra.mxu0 %v2580
    %2765 = vmatpush.bf16.msra.mxu0 %v2577
    %2766 = vmatmul.bf16.gmra.mxu0 %v2094
    %v2767 = vpop.f32.mrf.mxu0
    %v2768 = vadd.f32 %v2755, %v2767
    %v2769 = vpop.f32.mrf.mxu0
    %2770 = vdwg.mxu0
    %2771 = vmatpush.bf16.msra.mxu0 %v2622
    %2772 = vmatpush.bf16.msra.mxu0 %v2619
    %2773 = vmatpush.bf16.msra.mxu0 %v2616
    %2774 = vmatpush.bf16.msra.mxu0 %v2613
    %2775 = vmatpush.bf16.msra.mxu0 %v2610
    %2776 = vmatpush.bf16.msra.mxu0 %v2607
    %2777 = vmatpush.bf16.msra.mxu0 %v2604
    %2778 = vmatpush.bf16.msra.mxu0 %v2601
    %2779 = vmatmul.bf16.gmra.mxu0 %v2095
    %v2780 = vpop.f32.mrf.mxu0
    %v2781 = vadd.f32 %v2768, %v2780
    %v2782 = vpop.f32.mrf.mxu0
    %2783 = vdwg.mxu0
    %2784 = vmatpush.bf16.msra.mxu0 %v2646
    %2785 = vmatpush.bf16.msra.mxu0 %v2643
    %2786 = vmatpush.bf16.msra.mxu0 %v2640
    %2787 = vmatpush.bf16.msra.mxu0 %v2637
    %2788 = vmatpush.bf16.msra.mxu0 %v2634
    %2789 = vmatpush.bf16.msra.mxu0 %v2631
    %2790 = vmatpush.bf16.msra.mxu0 %v2628
    %2791 = vmatpush.bf16.msra.mxu0 %v2625
    %2792 = vmatmul.bf16.gmra.mxu0 %v2096
    %v2793 = vpop.f32.mrf.mxu0
    %v2794 = vadd.f32 %v2781, %v2793
    %v2795 = vpop.f32.mrf.mxu0
    %2796 = vdwg.mxu0
    %2797 = vmatpush.bf16.msra.mxu0 %v2575
    %2798 = vmatpush.bf16.msra.mxu0 %v2572
    %2799 = vmatpush.bf16.msra.mxu0 %v2569
    %2800 = vmatpush.bf16.msra.mxu0 %v2566
    %2801 = vmatpush.bf16.msra.mxu0 %v2563
    %2802 = vmatpush.bf16.msra.mxu0 %v2560
    %2803 = vmatpush.bf16.msra.mxu0 %v2557
    %2804 = vmatpush.bf16.msra.mxu0 %v2554
    %2805 = vmatmul.bf16.gmra.mxu0 %v2093
    %v2806 = vpop.f32.mrf.mxu0
    %v2807 = vadd.f32 %v2228, %v2806
    %v2808 = vpop.f32.mrf.mxu0
    %2809 = vdwg.mxu0
    %2810 = vmatpush.bf16.msra.mxu0 %v2599
    %2811 = vmatpush.bf16.msra.mxu0 %v2596
    %2812 = vmatpush.bf16.msra.mxu0 %v2593
    %2813 = vmatpush.bf16.msra.mxu0 %v2590
    %2814 = vmatpush.bf16.msra.mxu0 %v2587
    %2815 = vmatpush.bf16.msra.mxu0 %v2584
    %2816 = vmatpush.bf16.msra.mxu0 %v2581
    %2817 = vmatpush.bf16.msra.mxu0 %v2578
    %2818 = vmatmul.bf16.gmra.mxu0 %v2094
    %v2819 = vpop.f32.mrf.mxu0
    %v2820 = vadd.f32 %v2807, %v2819
    %v2821 = vpop.f32.mrf.mxu0
    %2822 = vdwg.mxu0
    %2823 = vmatpush.bf16.msra.mxu0 %v2623
    %2824 = vmatpush.bf16.msra.mxu0 %v2620
    %2825 = vmatpush.bf16.msra.mxu0 %v2617
    %2826 = vmatpush.bf16.msra.mxu0 %v2614
    %2827 = vmatpush.bf16.msra.mxu0 %v2611
    %2828 = vmatpush.bf16.msra.mxu0 %v2608
    %2829 = vmatpush.bf16.msra.mxu0 %v2605
    %2830 = vmatpush.bf16.msra.mxu0 %v2602
    %2831 = vmatmul.bf16.gmra.mxu0 %v2095
    %v2832 = vpop.f32.mrf.mxu0
    %v2833 = vadd.f32 %v2820, %v2832
    %v2834 = vpop.f32.mrf.mxu0
    %2835 = vdwg.mxu0
    %2836 = vmatpush.bf16.msra.mxu0 %v2647
    %2837 = vmatpush.bf16.msra.mxu0 %v2644
    %2838 = vmatpush.bf16.msra.mxu0 %v2641
    %2839 = vmatpush.bf16.msra.mxu0 %v2638
    %2840 = vmatpush.bf16.msra.mxu0 %v2635
    %2841 = vmatpush.bf16.msra.mxu0 %v2632
    %2842 = vmatpush.bf16.msra.mxu0 %v2629
    %2843 = vmatpush.bf16.msra.mxu0 %v2626
    %2844 = vmatmul.bf16.gmra.mxu0 %v2096
    %v2845 = vpop.f32.mrf.mxu0
    %v2846 = vadd.f32 %v2833, %v2845
    %v2847 = vpop.f32.mrf.mxu0
    %2848 = vdwg.mxu0
    %2849 = vmatpush.bf16.msra.mxu0 %v2576
    %2850 = vmatpush.bf16.msra.mxu0 %v2573
    %2851 = vmatpush.bf16.msra.mxu0 %v2570
    %2852 = vmatpush.bf16.msra.mxu0 %v2567
    %2853 = vmatpush.bf16.msra.mxu0 %v2564
    %2854 = vmatpush.bf16.msra.mxu0 %v2561
    %2855 = vmatpush.bf16.msra.mxu0 %v2558
    %2856 = vmatpush.bf16.msra.mxu0 %v2555
    %2857 = vmatmul.bf16.gmra.mxu0 %v2093
    %v2858 = vpop.f32.mrf.mxu0
    %v2859 = vadd.f32 %v2229, %v2858
    %v2860 = vpop.f32.mrf.mxu0
    %2861 = vdwg.mxu0
    %2862 = vmatpush.bf16.msra.mxu0 %v2600
    %2863 = vmatpush.bf16.msra.mxu0 %v2597
    %2864 = vmatpush.bf16.msra.mxu0 %v2594
    %2865 = vmatpush.bf16.msra.mxu0 %v2591
    %2866 = vmatpush.bf16.msra.mxu0 %v2588
    %2867 = vmatpush.bf16.msra.mxu0 %v2585
    %2868 = vmatpush.bf16.msra.mxu0 %v2582
    %2869 = vmatpush.bf16.msra.mxu0 %v2579
    %2870 = vmatmul.bf16.gmra.mxu0 %v2094
    %v2871 = vpop.f32.mrf.mxu0
    %v2872 = vadd.f32 %v2859, %v2871
    %v2873 = vpop.f32.mrf.mxu0
    %2874 = vdwg.mxu0
    %2875 = vmatpush.bf16.msra.mxu0 %v2624
    %2876 = vmatpush.bf16.msra.mxu0 %v2621
    %2877 = vmatpush.bf16.msra.mxu0 %v2618
    %2878 = vmatpush.bf16.msra.mxu0 %v2615
    %2879 = vmatpush.bf16.msra.mxu0 %v2612
    %2880 = vmatpush.bf16.msra.mxu0 %v2609
    %2881 = vmatpush.bf16.msra.mxu0 %v2606
    %2882 = vmatpush.bf16.msra.mxu0 %v2603
    %2883 = vmatmul.bf16.gmra.mxu0 %v2095
    %v2884 = vpop.f32.mrf.mxu0
    %v2885 = vadd.f32 %v2872, %v2884
    %v2886 = vpop.f32.mrf.mxu0
    %2887 = vdwg.mxu0
    %2888 = vmatpush.bf16.msra.mxu0 %v2648
    %2889 = vmatpush.bf16.msra.mxu0 %v2645
    %2890 = vmatpush.bf16.msra.mxu0 %v2642
    %2891 = vmatpush.bf16.msra.mxu0 %v2639
    %2892 = vmatpush.bf16.msra.mxu0 %v2636
    %2893 = vmatpush.bf16.msra.mxu0 %v2633
    %2894 = vmatpush.bf16.msra.mxu0 %v2630
    %2895 = vmatpush.bf16.msra.mxu0 %v2627
    %2896 = vmatmul.bf16.gmra.mxu0 %v2096
    %v2897 = vpop.f32.mrf.mxu0
    %v2898 = vadd.f32 %v2885, %v2897
    %v2899 = vpop.f32.mrf.mxu0
    %2900 = vdwg.mxu0
    %v2901 = vmax.f32 %v2794, 0.0
    %v2902 = vmax.f32 %v2846, 0.0
    %v2903 = vmax.f32 %v2898, 0.0
    %v2904 = vld [vmem:[#allocation9] sm:$0x7]
    %v2906 = vperm.slane %v2904, 0
    %v2907 = vperm.slane %v2904, 1
    %v2908 = vperm.slane %v2904, 2
    %v2912 = vmul.f32 %v2901, %v2906
    %v2913 = vmul.f32 %v2902, %v2907
    %v2914 = vmul.f32 %v2903, %v2908
    %v2915 = vadd.f32 %v2912, %v2913
    %v2916 = vadd.f32 %v2915, %v2914
    %2917 = vadd.xlane.f32.xlu0 %v2916
    %v2918 = vpop.xlane.xlu0 %2917
    %vm2919 = vcmask 7168
    %2920 = vst.msk [vmem:[%s6] sm:$0xff] %vm2919, %v2918
    // Predicated region
    $region46: #{tpu_custom_call.1} parent=1 // pred_check
      _
    $region47: #{tpu_custom_call.1} parent=1 // pred_check_branch
      %2922 = sbr.rel (0) target = $region49
    $region48: #{tpu_custom_call.1} parent=1 // pred_region
      _
    $region49: #{tpu_custom_call.1} parent=1 // pred_fallthru
      _
    // Predicated region
    $region50: #{tpu_custom_call.1} parent=1 // pred_check
      _
    $region51: #{tpu_custom_call.1} parent=1 // pred_check_branch
      %2924 = sbr.rel (0) target = $region53
    $region52: #{tpu_custom_call.1} parent=1 // pred_region
      _
    $region53: #{tpu_custom_call.1} parent=1 // pred_fallthru
      _
    %2925 = vsyncpa [#allocation3], 1
    %2926 = vsyncpa [#allocation5], 1
    %2927 = vsyncpa [#allocation8], 1

</llo_original>
